<compile_context>
chip_gen: v5e
topology: v5e:2x2
jax: 0.10.0
libtpu: 0.0.40
codegen_flags: <defaults>
</compile_context>

<pallas_src>
import jax
import jax.numpy as jnp
from jax.experimental import pallas as pl
from jax.experimental.pallas import tpu as pltpu

# ---------------- small synthetic config ----------------
B = 2            # batch
SEQ_LEN = 4      # image sequence length (cfg.INPUT.SEQ_LEN)
H = W = 32       # spatial size
HW = H * W       # 1024 -> full lane-width multiples
C_IMG = 3        # RGB
C_SEM = 5        # background / "stuff" logit channels (bg_logits)
N_INST = 4       # foreground instances per image (pasted full-res mask logits)
C_FEAT = 8       # bg_feats channels
C_IN = C_SEM + 1 + 1 + N_INST + C_FEAT   # refine-head input channels (= 19)
C_PAD = 24       # channel pad to a sublane (8) multiple; padded weights are zero
C_HID = 32       # refine-head hidden channels
C_OUT = C_SEM + N_INST                   # joint panoptic logits (stuff + things = 9)


def _images_per_step():
    """Images handled per grid step.  Per-image steps only pay off where >1
    TensorCore can pick them up (v7x / megacore chips); on single-TC chips
    (v5e/v6e) the serial grid loop is pure overhead, so take the whole batch
    in one step there."""
    try:
        kind = jax.devices()[0].device_kind.lower()
    except Exception:
        return 1  # safe default: per-image parallel grid (correct everywhere)
    single_tc = any(t in kind for t in
                    ("v5e", "v5 lite", "v5lite", "v6e", "v6 lite", "v6lite", "lite"))
    return B if single_tc else 1


# ---------------- kernel 1: pixel normalization (preprocess_image) ----------------
def _normalize_kernel(mean_ref, inv_std_ref, img_ref, out_ref):
    # mean_ref / inv_std_ref: (C_IMG,) SMEM scalars; img/out: (1, C_IMG, HW) VMEM
    for c in range(C_IMG):  # static unroll over the 3 channels
        out_ref[:, c, :] = (img_ref[:, c, :] - mean_ref[c]) * inv_std_ref[c]


def preprocess_images(images, pixel_mean, pixel_std):
    """images: (B, SEQ_LEN, C_IMG, H, W) float32 -> normalized, same shape."""
    n = images.shape[0] * images.shape[1]
    x = images.reshape(n, C_IMG, HW).astype(jnp.float32)
    mean = pixel_mean.reshape(C_IMG).astype(jnp.float32)
    inv_std = (1.0 / pixel_std).reshape(C_IMG).astype(jnp.float32)
    out = pl.pallas_call(
        _normalize_kernel,
        out_shape=jax.ShapeDtypeStruct((n, C_IMG, HW), jnp.float32),
        grid=(n,),  # per-image steps -> in/out DMA overlap, megacore split on v7x
        in_specs=[
            pl.BlockSpec(memory_space=pltpu.MemorySpace.SMEM),   # pixel_mean scalars
            pl.BlockSpec(memory_space=pltpu.MemorySpace.SMEM),   # 1/pixel_std scalars
            pl.BlockSpec((1, C_IMG, HW), lambda i: (i, 0, 0)),
        ],
        out_specs=pl.BlockSpec((1, C_IMG, HW), lambda i: (i, 0, 0)),
        compiler_params=pltpu.CompilerParams(dimension_semantics=("parallel",)),
    )(mean, inv_std, x)
    return out.reshape(images.shape)


# ---------------- kernel 2: fused refine head (packed channel-major input) ----------------
def _refine_kernel(x_ref, w1t_ref, b1_ref, w2t_ref, b2_ref,
                   logits_ref, pan_ref, score_ref):
    nb = x_ref.shape[0]          # images in this block (1 or B), static
    w1t = w1t_ref[...]           # (C_HID, C_PAD)  (zero-padded columns beyond C_IN)
    b1 = b1_ref[...]             # (C_HID, 1)
    w2t = w2t_ref[...]           # (C_OUT, C_HID)
    b2 = b2_ref[...]             # (C_OUT, 1)

    for b in range(nb):          # static unroll
        x = x_ref[b]             # (C_PAD, HW) channel-major: pixels on lanes

        # first 1x1 conv: single K=C_PAD matmul (packed input), then ReLU
        h = jnp.dot(w1t, x, preferred_element_type=jnp.float32) + b1
        h = jnp.maximum(h, 0.0)                                   # (C_HID, HW)

        # second 1x1 conv -> joint panoptic logits, lane-dense
        logits = jnp.dot(w2t, h, preferred_element_type=jnp.float32) + b2  # (C_OUT, HW)
        logits_ref[b] = logits

        # single-pass argmax over the 9 static channel rows (first-index tie-break)
        best_val = logits[0:1, :]
        best_idx = jnp.zeros((1, HW), jnp.int32)
        for c in range(1, C_OUT):
            v = logits[c:c + 1, :]
            take = v > best_val
            best_val = jnp.where(take, v, best_val)
            best_idx = jnp.where(take, c, best_idx)
        pan_ref[b] = best_idx

        # per-instance score = spatial mean of sigmoid(instance logits)
        inst = jax.nn.sigmoid(logits[C_SEM:, :])                  # (N_INST, HW)
        score_ref[b] = jnp.sum(inst, axis=1, keepdims=True) * (1.0 / HW)


def refine_head_forward(bg_logits, bg_depths, bg_depth_masks,
                        fg_mask_logits, bg_feats, params):
    """All spatial inputs are NCHW float32; returns (refined_logits NCHW,
    panoptic_seg (B,H,W) int32, scores (B, N_INST) float32)."""
    w1, b1, w2, b2 = params
    # zero-pad the first-conv weight columns 19 -> 24 to match the packed input
    w1t = jnp.zeros((C_HID, C_PAD), jnp.float32)
    w1t = w1t.at[:, :C_IN].set(jnp.asarray(w1, jnp.float32).T)     # (C_HID, C_PAD)
    b1c = jnp.asarray(b1, jnp.float32).reshape(C_HID, 1)
    w2t = jnp.asarray(w2, jnp.float32).T                           # (C_OUT, C_HID)
    b2c = jnp.asarray(b2, jnp.float32).reshape(C_OUT, 1)

    # pack all channel-major inputs into ONE (B, C_PAD, HW) tensor (cheap concat,
    # NCHW -> (B,C,HW) reshapes are free; no per-pixel transpose, no HBM (B*HW,19))
    x = jnp.concatenate([
        bg_logits.reshape(B, C_SEM, HW),
        bg_depths.reshape(B, 1, HW),
        bg_depth_masks.reshape(B, 1, HW),
        fg_mask_logits.reshape(B, N_INST, HW),
        bg_feats.reshape(B, C_FEAT, HW),
        jnp.zeros((B, C_PAD - C_IN, HW), jnp.float32),
    ], axis=1).astype(jnp.float32)

    nb = _images_per_step()          # B on single-TC chips, 1 on multi-TC chips
    grid = (B // nb,)

    logits_out, pan_out, score_out = pl.pallas_call(
        _refine_kernel,
        out_shape=(
            jax.ShapeDtypeStruct((B, C_OUT, HW), jnp.float32),
            jax.ShapeDtypeStruct((B, 1, HW), jnp.int32),
            jax.ShapeDtypeStruct((B, N_INST, 1), jnp.float32),
        ),
        grid=grid,
        in_specs=[
            pl.BlockSpec((nb, C_PAD, HW), lambda i: (i, 0, 0)),
            pl.BlockSpec((C_HID, C_PAD), lambda i: (0, 0)),
            pl.BlockSpec((C_HID, 1), lambda i: (0, 0)),
            pl.BlockSpec((C_OUT, C_HID), lambda i: (0, 0)),
            pl.BlockSpec((C_OUT, 1), lambda i: (0, 0)),
        ],
        out_specs=(
            pl.BlockSpec((nb, C_OUT, HW), lambda i: (i, 0, 0)),
            pl.BlockSpec((nb, 1, HW), lambda i: (i, 0, 0)),
            pl.BlockSpec((nb, N_INST, 1), lambda i: (i, 0, 0)),
        ),
        compiler_params=pltpu.CompilerParams(
            dimension_semantics=("parallel",)),  # images independent
    )(x, w1t, b1c, w2t, b2c)

    refined_logits = logits_out.reshape(B, C_OUT, H, W)   # already NCHW-ordered
    panoptic_seg = pan_out.reshape(B, H, W)
    scores = score_out.reshape(B, N_INST)
    return refined_logits, panoptic_seg, scores


# ---------------- whole accelerated forward under a single jit ----------------
@jax.jit
def forward(images, pixel_mean, pixel_std,
            bg_logits, bg_depths, bg_depth_masks, fg_mask_logits, bg_feats,
            w1, b1, w2, b2):
    # TODO(synk): backbone / RPN / ROI heads / transformer encoder+decoder and
    # Instances/ImageList bookkeeping have no clean Pallas equivalent; their
    # (synthetic) outputs feed the trainable refine head below.
    norm_images = preprocess_images(images, pixel_mean, pixel_std)
    refined_logits, panoptic_seg, scores = refine_head_forward(
        bg_logits, bg_depths, bg_depth_masks, fg_mask_logits, bg_feats,
        (w1, b1, w2, b2))
    return norm_images, refined_logits, panoptic_seg, scores


# ---------------- pure-JAX reference for the refine head ----------------
def _refine_reference(x, w1, b1, w2, b2):
    h = jnp.maximum(x @ w1 + b1, 0.0)
    logits = h @ w2 + b2
    pan = jnp.argmax(logits, axis=-1).astype(jnp.int32)
    inst = jax.nn.sigmoid(logits[:, C_SEM:]).reshape(B, HW, N_INST)
    scores = inst.mean(axis=1)
    return logits, pan, scores


if __name__ == "__main__":
    key = jax.random.PRNGKey(0)
    k = jax.random.split(key, 6)
    images = jax.random.normal(k[0], (B, SEQ_LEN, C_IMG, H, W), jnp.float32) * 50.0 + 100.0
    bg_logits = jax.random.normal(k[1], (B, C_SEM, H, W), jnp.float32)
    bg_depths = jax.random.uniform(k[2], (B, 1, H, W), jnp.float32) * 10.0
    bg_depth_masks = (jax.random.uniform(k[3], (B, 1, H, W)) > 0.2).astype(jnp.float32)
    fg_mask_logits = jax.random.normal(k[4], (B, N_INST, H, W), jnp.float32)
    bg_feats = jax.random.normal(k[5], (B, C_FEAT, H, W), jnp.float32)

    # deterministic refine-head parameters (synthetic; no checkpoint load)
    pk = jax.random.split(jax.random.PRNGKey(42), 4)
    w1 = jax.random.normal(pk[0], (C_IN, C_HID), jnp.float32) / jnp.sqrt(float(C_IN))
    b1 = jax.random.normal(pk[1], (1, C_HID), jnp.float32) * 0.01
    w2 = jax.random.normal(pk[2], (C_HID, C_OUT), jnp.float32) / jnp.sqrt(float(C_HID))
    b2 = jax.random.normal(pk[3], (1, C_OUT), jnp.float32) * 0.01

    pixel_mean = jnp.array([103.53, 116.28, 123.675], jnp.float32)
    pixel_std = jnp.array([57.375, 57.12, 58.395], jnp.float32)

    norm_images, refined_logits, panoptic_seg, scores = forward(
        images, pixel_mean, pixel_std,
        bg_logits, bg_depths, bg_depth_masks, fg_mask_logits, bg_feats,
        w1, b1, w2, b2)
    jax.block_until_ready((norm_images, refined_logits, panoptic_seg, scores))

    # ---- correctness checks against plain-JAX references (loose fp32/MXU tolerance) ----
    norm_ref = (images - pixel_mean.reshape(1, 1, C_IMG, 1, 1)) / pixel_std.reshape(1, 1, C_IMG, 1, 1)
    assert jnp.allclose(norm_images, norm_ref, rtol=1e-5, atol=1e-5)

    def nchw_to_pc(t):
        return jnp.transpose(t, (0, 2, 3, 1)).reshape(B * HW, t.shape[1])
    x_ref = jnp.concatenate([nchw_to_pc(bg_logits), nchw_to_pc(bg_depths),
                             nchw_to_pc(bg_depth_masks), nchw_to_pc(fg_mask_logits),
                             nchw_to_pc(bg_feats)], axis=-1)
    logits_exp, pan_exp, scores_exp = _refine_reference(x_ref, w1, b1, w2, b2)
    logits_exp_nchw = jnp.transpose(logits_exp.reshape(B, H, W, C_OUT), (0, 3, 1, 2))

    assert jnp.allclose(refined_logits, logits_exp_nchw, rtol=5e-2, atol=5e-2)
    assert jnp.allclose(scores, scores_exp, rtol=5e-2, atol=5e-2)
    agree = jnp.mean((panoptic_seg.reshape(-1) == pan_exp).astype(jnp.float32))
    assert agree >= 0.99  # argmax may differ only at numerical near-ties

    print("KERNEL_OK")
</pallas_src>

<mosaic_0001>
module attributes {stable_mosaic.version = 11 : i64} {
  func.func @_normalize_kernel(%arg0: i32, %arg1: memref<3xf32, #tpu.memory_space<smem>>, %arg2: memref<3xf32, #tpu.memory_space<smem>>, %arg3: memref<1x3x1024xf32, #tpu.memory_space<vmem>>, %arg4: memref<1x3x1024xf32, #tpu.memory_space<vmem>>) attributes {dimension_semantics = [#tpu.dimension_semantics<parallel>], iteration_bounds = array<i64: 8>, scalar_prefetch = 0 : i64, scratch_operands = 0 : i64, tpu.core_type = #tpu.core_type<tc>, window_params = [{transform_indices = @transform_0, window_bounds = array<i64: 3>}, {transform_indices = @transform_1, window_bounds = array<i64: 3>}, {transform_indices = @transform_2, window_bounds = array<i64: 1, 3, 1024>}, {transform_indices = @transform_3, window_bounds = array<i64: 1, 3, 1024>}]} {
    %c0 = arith.constant 0 : index
    %c0_0 = arith.constant 0 : index
    %c0_1 = arith.constant 0 : index
    %0 = vector.load %arg3[%c0, %c0_0, %c0_1] : memref<1x3x1024xf32, #tpu.memory_space<vmem>>, vector<1x1x1024xf32>
    %1 = vector.shape_cast %0 : vector<1x1x1024xf32> to vector<1x1024xf32>
    %c0_2 = arith.constant 0 : index
    %2 = memref.load %arg1[%c0_2] : memref<3xf32, #tpu.memory_space<smem>>
    %3 = vector.broadcast %2 : f32 to vector<1x1024xf32>
    %4 = arith.subf %1, %3 : vector<1x1024xf32>
    %c0_3 = arith.constant 0 : index
    %5 = memref.load %arg2[%c0_3] : memref<3xf32, #tpu.memory_space<smem>>
    %6 = vector.broadcast %5 : f32 to vector<1x1024xf32>
    %7 = arith.mulf %4, %6 : vector<1x1024xf32>
    %c0_4 = arith.constant 0 : index
    %c0_5 = arith.constant 0 : index
    %c0_6 = arith.constant 0 : index
    %8 = vector.load %arg4[%c0_4, %c0_5, %c0_6] : memref<1x3x1024xf32, #tpu.memory_space<vmem>>, vector<1x1x1024xf32>
    %9 = vector.shape_cast %8 : vector<1x1x1024xf32> to vector<1x1024xf32>
    %10 = vector.shape_cast %7 : vector<1x1024xf32> to vector<1x1x1024xf32>
    tpu.vector_store %arg4[%c0_4, %c0_5, %c0_6], %10 {strides = array<i32>} : memref<1x3x1024xf32, #tpu.memory_space<vmem>>, vector<1x1x1024xf32>,
    %c0_7 = arith.constant 0 : index
    %c1 = arith.constant 1 : index
    %c0_8 = arith.constant 0 : index
    %11 = vector.load %arg3[%c0_7, %c1, %c0_8] : memref<1x3x1024xf32, #tpu.memory_space<vmem>>, vector<1x1x1024xf32>
    %12 = vector.shape_cast %11 : vector<1x1x1024xf32> to vector<1x1024xf32>
    %c1_9 = arith.constant 1 : index
    %13 = memref.load %arg1[%c1_9] : memref<3xf32, #tpu.memory_space<smem>>
    %14 = vector.broadcast %13 : f32 to vector<1x1024xf32>
    %15 = arith.subf %12, %14 : vector<1x1024xf32>
    %c1_10 = arith.constant 1 : index
    %16 = memref.load %arg2[%c1_10] : memref<3xf32, #tpu.memory_space<smem>>
    %17 = vector.broadcast %16 : f32 to vector<1x1024xf32>
    %18 = arith.mulf %15, %17 : vector<1x1024xf32>
    %c0_11 = arith.constant 0 : index
    %c1_12 = arith.constant 1 : index
    %c0_13 = arith.constant 0 : index
    %19 = vector.load %arg4[%c0_11, %c1_12, %c0_13] : memref<1x3x1024xf32, #tpu.memory_space<vmem>>, vector<1x1x1024xf32>
    %20 = vector.shape_cast %19 : vector<1x1x1024xf32> to vector<1x1024xf32>
    %21 = vector.shape_cast %18 : vector<1x1024xf32> to vector<1x1x1024xf32>
    tpu.vector_store %arg4[%c0_11, %c1_12, %c0_13], %21 {strides = array<i32>} : memref<1x3x1024xf32, #tpu.memory_space<vmem>>, vector<1x1x1024xf32>,
    %c0_14 = arith.constant 0 : index
    %c2 = arith.constant 2 : index
    %c0_15 = arith.constant 0 : index
    %22 = vector.load %arg3[%c0_14, %c2, %c0_15] : memref<1x3x1024xf32, #tpu.memory_space<vmem>>, vector<1x1x1024xf32>
    %23 = vector.shape_cast %22 : vector<1x1x1024xf32> to vector<1x1024xf32>
    %c2_16 = arith.constant 2 : index
    %24 = memref.load %arg1[%c2_16] : memref<3xf32, #tpu.memory_space<smem>>
    %25 = vector.broadcast %24 : f32 to vector<1x1024xf32>
    %26 = arith.subf %23, %25 : vector<1x1024xf32>
    %c2_17 = arith.constant 2 : index
    %27 = memref.load %arg2[%c2_17] : memref<3xf32, #tpu.memory_space<smem>>
    %28 = vector.broadcast %27 : f32 to vector<1x1024xf32>
    %29 = arith.mulf %26, %28 : vector<1x1024xf32>
    %c0_18 = arith.constant 0 : index
    %c2_19 = arith.constant 2 : index
    %c0_20 = arith.constant 0 : index
    %30 = vector.load %arg4[%c0_18, %c2_19, %c0_20] : memref<1x3x1024xf32, #tpu.memory_space<vmem>>, vector<1x1x1024xf32>
    %31 = vector.shape_cast %30 : vector<1x1x1024xf32> to vector<1x1024xf32>
    %32 = vector.shape_cast %29 : vector<1x1024xf32> to vector<1x1x1024xf32>
    tpu.vector_store %arg4[%c0_18, %c2_19, %c0_20], %32 {strides = array<i32>} : memref<1x3x1024xf32, #tpu.memory_space<vmem>>, vector<1x1x1024xf32>,
    return
  }
  func.func @transform_0(%arg0: i32) -> i32 {
    %c0_i32 = arith.constant 0 : i32
    %c0_i32_0 = arith.constant 0 : i32
    return %c0_i32 : i32
  }
  func.func @transform_1(%arg0: i32) -> i32 {
    %c0_i32 = arith.constant 0 : i32
    %c0_i32_0 = arith.constant 0 : i32
    return %c0_i32 : i32
  }
  func.func @transform_2(%arg0: i32) -> (i32, i32, i32) {
    %c0_i32 = arith.constant 0 : i32
    %c0_i32_0 = arith.constant 0 : i32
    %c0_i32_1 = arith.constant 0 : i32
    return %arg0, %c0_i32, %c0_i32_0 : i32, i32, i32
  }
  func.func @transform_3(%arg0: i32) -> (i32, i32, i32) {
    %c0_i32 = arith.constant 0 : i32
    %c0_i32_0 = arith.constant 0 : i32
    %c0_i32_1 = arith.constant 0 : i32
    return %arg0, %c0_i32, %c0_i32_0 : i32, i32, i32
  }
}

module attributes {stable_mosaic.version = 11 : i64} {
  func.func @_refine_kernel(%arg0: i32, %arg1: memref<1x24x1024xf32, #tpu.memory_space<vmem>>, %arg2: memref<32x24xf32, #tpu.memory_space<vmem>>, %arg3: memref<32x1xf32, #tpu.memory_space<vmem>>, %arg4: memref<9x32xf32, #tpu.memory_space<vmem>>, %arg5: memref<9x1xf32, #tpu.memory_space<vmem>>, %arg6: memref<1x9x1024xf32, #tpu.memory_space<vmem>>, %arg7: memref<1x1x1024xi32, #tpu.memory_space<vmem>>, %arg8: memref<1x4x1xf32, #tpu.memory_space<vmem>>) attributes {dimension_semantics = [#tpu.dimension_semantics<parallel>], iteration_bounds = array<i64: 2>, scalar_prefetch = 0 : i64, scratch_operands = 0 : i64, tpu.core_type = #tpu.core_type<tc>, window_params = [{transform_indices = @transform_0, window_bounds = array<i64: 1, 24, 1024>}, {pipeline_mode = #tpu.pipeline_mode<synchronous>, transform_indices = @transform_1, window_bounds = array<i64: 32, 24>}, {pipeline_mode = #tpu.pipeline_mode<synchronous>, transform_indices = @transform_2, window_bounds = array<i64: 32, 1>}, {pipeline_mode = #tpu.pipeline_mode<synchronous>, transform_indices = @transform_3, window_bounds = array<i64: 9, 32>}, {pipeline_mode = #tpu.pipeline_mode<synchronous>, transform_indices = @transform_4, window_bounds = array<i64: 9, 1>}, {transform_indices = @transform_5, window_bounds = array<i64: 1, 9, 1024>}, {transform_indices = @transform_6, window_bounds = array<i64: 1, 1, 1024>}, {transform_indices = @transform_7, window_bounds = array<i64: 1, 4, 1>}]} {
    %c0 = arith.constant 0 : index
    %c0_0 = arith.constant 0 : index
    %0 = vector.load %arg2[%c0, %c0_0] : memref<32x24xf32, #tpu.memory_space<vmem>>, vector<32x24xf32>
    %c0_1 = arith.constant 0 : index
    %c0_2 = arith.constant 0 : index
    %1 = vector.load %arg3[%c0_1, %c0_2] : memref<32x1xf32, #tpu.memory_space<vmem>>, vector<32x1xf32>
    %c0_3 = arith.constant 0 : index
    %c0_4 = arith.constant 0 : index
    %2 = vector.load %arg4[%c0_3, %c0_4] : memref<9x32xf32, #tpu.memory_space<vmem>>, vector<9x32xf32>
    %c0_5 = arith.constant 0 : index
    %c0_6 = arith.constant 0 : index
    %3 = vector.load %arg5[%c0_5, %c0_6] : memref<9x1xf32, #tpu.memory_space<vmem>>, vector<9x1xf32>
    %c0_7 = arith.constant 0 : index
    %c0_8 = arith.constant 0 : index
    %c0_9 = arith.constant 0 : index
    %4 = vector.load %arg1[%c0_7, %c0_8, %c0_9] : memref<1x24x1024xf32, #tpu.memory_space<vmem>>, vector<1x24x1024xf32>
    %5 = vector.shape_cast %4 : vector<1x24x1024xf32> to vector<24x1024xf32>
    %cst = arith.constant dense<0.000000e+00> : vector<32x1024xf32>
    %6 = tpu.matmul %0, %5, %cst {dimension_numbers = #tpu.dot_dimension_numbers<[1], [0], [0], [1], [0, 0, 1, 1], [], []>} : vector<32x24xf32>, vector<24x1024xf32>, vector<32x1024xf32> -> vector<32x1024xf32>
    %7 = vector.broadcast %1 : vector<32x1xf32> to vector<32x1024xf32>
    %8 = arith.addf %6, %7 : vector<32x1024xf32>
    %cst_10 = arith.constant 0.000000e+00 : f32
    %9 = vector.broadcast %cst_10 : f32 to vector<32x1024xf32>
    %10 = arith.maximumf %8, %9 : vector<32x1024xf32>
    %cst_11 = arith.constant dense<0.000000e+00> : vector<9x1024xf32>
    %11 = tpu.matmul %2, %10, %cst_11 {dimension_numbers = #tpu.dot_dimension_numbers<[1], [0], [0], [1], [0, 0, 1, 1], [], []>} : vector<9x32xf32>, vector<32x1024xf32>, vector<9x1024xf32> -> vector<9x1024xf32>
    %12 = vector.broadcast %3 : vector<9x1xf32> to vector<9x1024xf32>
    %13 = arith.addf %11, %12 : vector<9x1024xf32>
    %c0_12 = arith.constant 0 : index
    %c0_13 = arith.constant 0 : index
    %c0_14 = arith.constant 0 : index
    %14 = vector.load %arg6[%c0_12, %c0_13, %c0_14] : memref<1x9x1024xf32, #tpu.memory_space<vmem>>, vector<1x9x1024xf32>
    %15 = vector.shape_cast %14 : vector<1x9x1024xf32> to vector<9x1024xf32>
    %16 = vector.shape_cast %13 : vector<9x1024xf32> to vector<1x9x1024xf32>
    tpu.vector_store %arg6[%c0_12, %c0_13, %c0_14], %16 {strides = array<i32>} : memref<1x9x1024xf32, #tpu.memory_space<vmem>>, vector<1x9x1024xf32>,
    %17 = vector.extract_strided_slice %13 {offsets = [0, 0], sizes = [1, 1024], strides = [1, 1]} : vector<9x1024xf32> to vector<1x1024xf32>
    %c0_i32 = arith.constant 0 : i32
    %18 = vector.broadcast %c0_i32 : i32 to vector<1x1024xi32>
    %19 = vector.extract_strided_slice %13 {offsets = [1, 0], sizes = [1, 1024], strides = [1, 1]} : vector<9x1024xf32> to vector<1x1024xf32>
    %20 = arith.cmpf ogt, %19, %17 : vector<1x1024xf32>
    %21 = arith.select %20, %19, %17 : vector<1x1024xi1>, vector<1x1024xf32>
    %c1_i32 = arith.constant 1 : i32
    %22 = vector.broadcast %c1_i32 : i32 to vector<1x1024xi32>
    %23 = arith.select %20, %22, %18 : vector<1x1024xi1>, vector<1x1024xi32>
    %24 = vector.extract_strided_slice %13 {offsets = [2, 0], sizes = [1, 1024], strides = [1, 1]} : vector<9x1024xf32> to vector<1x1024xf32>
    %25 = arith.cmpf ogt, %24, %21 : vector<1x1024xf32>
    %26 = arith.select %25, %24, %21 : vector<1x1024xi1>, vector<1x1024xf32>
    %c2_i32 = arith.constant 2 : i32
    %27 = vector.broadcast %c2_i32 : i32 to vector<1x1024xi32>
    %28 = arith.select %25, %27, %23 : vector<1x1024xi1>, vector<1x1024xi32>
    %29 = vector.extract_strided_slice %13 {offsets = [3, 0], sizes = [1, 1024], strides = [1, 1]} : vector<9x1024xf32> to vector<1x1024xf32>
    %30 = arith.cmpf ogt, %29, %26 : vector<1x1024xf32>
    %31 = arith.select %30, %29, %26 : vector<1x1024xi1>, vector<1x1024xf32>
    %c3_i32 = arith.constant 3 : i32
    %32 = vector.broadcast %c3_i32 : i32 to vector<1x1024xi32>
    %33 = arith.select %30, %32, %28 : vector<1x1024xi1>, vector<1x1024xi32>
    %34 = vector.extract_strided_slice %13 {offsets = [4, 0], sizes = [1, 1024], strides = [1, 1]} : vector<9x1024xf32> to vector<1x1024xf32>
    %35 = arith.cmpf ogt, %34, %31 : vector<1x1024xf32>
    %36 = arith.select %35, %34, %31 : vector<1x1024xi1>, vector<1x1024xf32>
    %c4_i32 = arith.constant 4 : i32
    %37 = vector.broadcast %c4_i32 : i32 to vector<1x1024xi32>
    %38 = arith.select %35, %37, %33 : vector<1x1024xi1>, vector<1x1024xi32>
    %39 = vector.extract_strided_slice %13 {offsets = [5, 0], sizes = [1, 1024], strides = [1, 1]} : vector<9x1024xf32> to vector<1x1024xf32>
    %40 = arith.cmpf ogt, %39, %36 : vector<1x1024xf32>
    %41 = arith.select %40, %39, %36 : vector<1x1024xi1>, vector<1x1024xf32>
    %c5_i32 = arith.constant 5 : i32
    %42 = vector.broadcast %c5_i32 : i32 to vector<1x1024xi32>
    %43 = arith.select %40, %42, %38 : vector<1x1024xi1>, vector<1x1024xi32>
    %44 = vector.extract_strided_slice %13 {offsets = [6, 0], sizes = [1, 1024], strides = [1, 1]} : vector<9x1024xf32> to vector<1x1024xf32>
    %45 = arith.cmpf ogt, %44, %41 : vector<1x1024xf32>
    %46 = arith.select %45, %44, %41 : vector<1x1024xi1>, vector<1x1024xf32>
    %c6_i32 = arith.constant 6 : i32
    %47 = vector.broadcast %c6_i32 : i32 to vector<1x1024xi32>
    %48 = arith.select %45, %47, %43 : vector<1x1024xi1>, vector<1x1024xi32>
    %49 = vector.extract_strided_slice %13 {offsets = [7, 0], sizes = [1, 1024], strides = [1, 1]} : vector<9x1024xf32> to vector<1x1024xf32>
    %50 = arith.cmpf ogt, %49, %46 : vector<1x1024xf32>
    %51 = arith.select %50, %49, %46 : vector<1x1024xi1>, vector<1x1024xf32>
    %c7_i32 = arith.constant 7 : i32
    %52 = vector.broadcast %c7_i32 : i32 to vector<1x1024xi32>
    %53 = arith.select %50, %52, %48 : vector<1x1024xi1>, vector<1x1024xi32>
    %54 = vector.extract_strided_slice %13 {offsets = [8, 0], sizes = [1, 1024], strides = [1, 1]} : vector<9x1024xf32> to vector<1x1024xf32>
    %55 = arith.cmpf ogt, %54, %51 : vector<1x1024xf32>
    %c8_i32 = arith.constant 8 : i32
    %56 = vector.broadcast %c8_i32 : i32 to vector<1x1024xi32>
    %57 = arith.select %55, %56, %53 : vector<1x1024xi1>, vector<1x1024xi32>
    %c0_15 = arith.constant 0 : index
    %c0_16 = arith.constant 0 : index
    %c0_17 = arith.constant 0 : index
    %58 = vector.load %arg7[%c0_15, %c0_16, %c0_17] : memref<1x1x1024xi32, #tpu.memory_space<vmem>>, vector<1x1x1024xi32>
    %59 = vector.shape_cast %58 : vector<1x1x1024xi32> to vector<1x1024xi32>
    %60 = vector.shape_cast %57 : vector<1x1024xi32> to vector<1x1x1024xi32>
    tpu.vector_store %arg7[%c0_15, %c0_16, %c0_17], %60 {strides = array<i32>} : memref<1x1x1024xi32, #tpu.memory_space<vmem>>, vector<1x1x1024xi32>,
    %61 = vector.extract_strided_slice %13 {offsets = [5, 0], sizes = [4, 1024], strides = [1, 1]} : vector<9x1024xf32> to vector<4x1024xf32>
    %62 = arith.negf %61 : vector<4x1024xf32>
    %63 = math.exp %62 : vector<4x1024xf32>
    %cst_18 = arith.constant 1.000000e+00 : f32
    %64 = vector.broadcast %cst_18 : f32 to vector<4x1024xf32>
    %65 = arith.addf %64, %63 : vector<4x1024xf32>
    %66 = arith.divf %64, %65 : vector<4x1024xf32>
    %cst_19 = arith.constant dense<0.000000e+00> : vector<4xf32>
    %67 = vector.multi_reduction <add>, %66, %cst_19 [1] : vector<4x1024xf32> to vector<4xf32>
    %68 = vector.shape_cast %67 : vector<4xf32> to vector<4x1xf32>
    %cst_20 = arith.constant 9.765625E-4 : f32
    %69 = vector.broadcast %cst_20 : f32 to vector<4x1xf32>
    %70 = arith.mulf %68, %69 : vector<4x1xf32>
    %c0_21 = arith.constant 0 : index
    %c0_22 = arith.constant 0 : index
    %c0_23 = arith.constant 0 : index
    %71 = vector.load %arg8[%c0_21, %c0_22, %c0_23] : memref<1x4x1xf32, #tpu.memory_space<vmem>>, vector<1x4x1xf32>
    %72 = vector.shape_cast %71 : vector<1x4x1xf32> to vector<4x1xf32>
    %73 = vector.shape_cast %70 : vector<4x1xf32> to vector<1x4x1xf32>
    tpu.vector_store %arg8[%c0_21, %c0_22, %c0_23], %73 {strides = array<i32>} : memref<1x4x1xf32, #tpu.memory_space<vmem>>, vector<1x4x1xf32>,
    return
  }
  func.func @transform_0(%arg0: i32) -> (i32, i32, i32) {
    %c0_i32 = arith.constant 0 : i32
    %c0_i32_0 = arith.constant 0 : i32
    %c0_i32_1 = arith.constant 0 : i32
    return %arg0, %c0_i32, %c0_i32_0 : i32, i32, i32
  }
  func.func @transform_1(%arg0: i32) -> (i32, i32) {
    %c0_i32 = arith.constant 0 : i32
    %c0_i32_0 = arith.constant 0 : i32
    %c0_i32_1 = arith.constant 0 : i32
    return %c0_i32, %c0_i32_0 : i32, i32
  }
  func.func @transform_2(%arg0: i32) -> (i32, i32) {
    %c0_i32 = arith.constant 0 : i32
    %c0_i32_0 = arith.constant 0 : i32
    %c0_i32_1 = arith.constant 0 : i32
    return %c0_i32, %c0_i32_0 : i32, i32
  }
  func.func @transform_3(%arg0: i32) -> (i32, i32) {
    %c0_i32 = arith.constant 0 : i32
    %c0_i32_0 = arith.constant 0 : i32
    %c0_i32_1 = arith.constant 0 : i32
    return %c0_i32, %c0_i32_0 : i32, i32
  }
  func.func @transform_4(%arg0: i32) -> (i32, i32) {
    %c0_i32 = arith.constant 0 : i32
    %c0_i32_0 = arith.constant 0 : i32
    %c0_i32_1 = arith.constant 0 : i32
    return %c0_i32, %c0_i32_0 : i32, i32
  }
  func.func @transform_5(%arg0: i32) -> (i32, i32, i32) {
    %c0_i32 = arith.constant 0 : i32
    %c0_i32_0 = arith.constant 0 : i32
    %c0_i32_1 = arith.constant 0 : i32
    return %arg0, %c0_i32, %c0_i32_0 : i32, i32, i32
  }
  func.func @transform_6(%arg0: i32) -> (i32, i32, i32) {
    %c0_i32 = arith.constant 0 : i32
    %c0_i32_0 = arith.constant 0 : i32
    %c0_i32_1 = arith.constant 0 : i32
    return %arg0, %c0_i32, %c0_i32_0 : i32, i32, i32
  }
  func.func @transform_7(%arg0: i32) -> (i32, i32, i32) {
    %c0_i32 = arith.constant 0 : i32
    %c0_i32_0 = arith.constant 0 : i32
    %c0_i32_1 = arith.constant 0 : i32
    return %arg0, %c0_i32, %c0_i32_0 : i32, i32, i32
  }
}

</mosaic_0001>

<llo_original>
// kernel: forward.2
$region0: #{forward.2}
  #allocation0 [shape = 'u32[]', space=smem, size = 0x4, offset = 0x4, fixed_abs, tag = 'smem constant byte address 0x4 - core index']
  #allocation1 [shape = 'u32[72,128]{1,0:T(1,128)}', space=vmem, size = 0x9000, scoped, tag = 'internal scratch']
  %s0 = inlined_call_operand.vmem [shape: f32[3], index: 0, kind: input, shape index: {}]
  %s1 = inlined_call_operand.vmem [shape: f32[3], index: 1, kind: input, shape index: {}]
  %s2 = inlined_call_operand.vmem [shape: f32[8,3,1024], index: 2, kind: input, shape index: {}]
  %s3 = inlined_call_operand.vmem [shape: f32[8,3,1024], index: 3, kind: output, shape index: {}]
  %s4 = sld [smem:[#allocation0]]
  $region53: #{forward.2} parent=0
    _
  %s6 = ssub.s32 1, %s4
  %s7 = scalar_select 0, %s6, %s4
  $region1: #{forward.2} parent=0
    #allocation2 [shape = 'u8[512]{0}', space=smem, size = 0x200, scoped, tag = 'input window, operand 0, single buffered']
    #allocation3 [shape = 's32[2]{0}', space=sflag, size = 0x8, scoped, tag = 'scoped memory for forward.2']
    #allocation4 [shape = 'u8[512]{0}', space=smem, size = 0x200, scoped, tag = 'input window, operand 1, single buffered']
    #allocation5 [shape = 's32[1]{0}', space=sflag, size = 0x4, scoped, tag = 'scoped memory for forward.2']
    %8 = vsyncpa [#allocation3], 0
    %9 = vsyncpa [#allocation5], 0
    loop: start=0, step=1, limit=10
    $region2: #{forward.2} parent=1 // loop_pre_header
      _
    $region3: #{forward.2} parent=1 // loop_header
      %s11 = sphi 0, %s15
      %p12 = scmp.ge.s32.totalorder %s11, 10
      %s19 = sphi 0, %s19
      %s21 = sphi 0, %s19
      %s22 = sphi 0, %s21
      %s36 = sphi 0, %s22
      %s40 = sphi 0, %s40
      %s42 = sphi 0, %s40
      %s43 = sphi 0, %s42
      %s57 = sphi 0, %s43
      %s63 = sphi 0, %s65
      %s66 = sphi 0, %s63
      %s67 = sphi 0, %s66
      %s83 = sphi 0, %s67
      %s89 = sphi 0, %s91
      %s92 = sphi 0, %s89
      %s93 = sphi 0, %s92
      %s109 = sphi 0, %s93
    $region4: #{forward.2} parent=1 // loop_header_branch
      %14 = sbr.rel (%p12) target = $region8
    $region5: #{forward.2} parent=1 // loop_body
      %s16 = ssub.s32 %s11, 1
      %s17 = ssub.s32 %s11, 2
      %s18 = sadd.s32 %s11, 1
      %s20 = sadd.s32 %s19, 1
      %p23 = scmp.eq.s32.totalorder %s11, 7
      %p24 = scmp.ne.s32.totalorder %s19, %s21
      %p25 = scmp.eq.s32.totalorder %s11, 0
      %p26 = por %p24, %p25
      %p27 = scmp.ne.s32.totalorder %s19, %s21
      %p28 = scmp.eq.s32.totalorder %s16, 7
      %p29 = por %p27, %p28
      %p30 = scmp.ne.s32.totalorder %s21, %s22
      %p31 = scmp.eq.s32.totalorder %s16, 0
      %p32 = por %p30, %p31
      %p33 = scmp.ne.s32.totalorder %s21, %s22
      %p34 = scmp.eq.s32.totalorder %s17, 7
      %p35 = por %p33, %p34
      %p37 = scmp.ne.s32.totalorder %s22, %s36
      %p38 = scmp.eq.s32.totalorder %s17, 0
      %p39 = por %p37, %p38
      %s41 = sadd.s32 %s40, 1
      %p44 = scmp.eq.s32.totalorder %s11, 7
      %p45 = scmp.ne.s32.totalorder %s40, %s42
      %p46 = scmp.eq.s32.totalorder %s11, 0
      %p47 = por %p45, %p46
      %p48 = scmp.ne.s32.totalorder %s40, %s42
      %p49 = scmp.eq.s32.totalorder %s16, 7
      %p50 = por %p48, %p49
      %p51 = scmp.ne.s32.totalorder %s42, %s43
      %p52 = scmp.eq.s32.totalorder %s16, 0
      %p53 = por %p51, %p52
      %p54 = scmp.ne.s32.totalorder %s42, %s43
      %p55 = scmp.eq.s32.totalorder %s17, 7
      %p56 = por %p54, %p55
      %p58 = scmp.ne.s32.totalorder %s43, %s57
      %p59 = scmp.eq.s32.totalorder %s17, 0
      %p60 = por %p58, %p59
      %s61 = ssub.s32 %s11, %s18
      %p62 = scmp.eq.s32.totalorder %s61, 0
      %s64 = sadd.s32 %s63, 1
      %s65 = scalar_select %p62, %s63, %s64
      %p68 = pneg %p62
      %p69 = scmp.eq.s32.totalorder %s11, 7
      %p70 = por %p68, %p69
      %p71 = scmp.ne.s32.totalorder %s63, %s66
      %p72 = scmp.eq.s32.totalorder %s11, 0
      %p73 = por %p71, %p72
      %p74 = scmp.ne.s32.totalorder %s63, %s66
      %p75 = scmp.eq.s32.totalorder %s16, 7
      %p76 = por %p74, %p75
      %p77 = scmp.ne.s32.totalorder %s66, %s67
      %p78 = scmp.eq.s32.totalorder %s16, 0
      %p79 = por %p77, %p78
      %p80 = scmp.ne.s32.totalorder %s66, %s67
      %p81 = scmp.eq.s32.totalorder %s17, 7
      %p82 = por %p80, %p81
      %p84 = scmp.ne.s32.totalorder %s67, %s83
      %p85 = scmp.eq.s32.totalorder %s17, 0
      %p86 = por %p84, %p85
      %s87 = ssub.s32 %s11, %s18
      %p88 = scmp.eq.s32.totalorder %s87, 0
      %s90 = sadd.s32 %s89, 1
      %s91 = scalar_select %p88, %s89, %s90
      %p94 = pneg %p88
      %p95 = scmp.eq.s32.totalorder %s11, 7
      %p96 = por %p94, %p95
      %p97 = scmp.ne.s32.totalorder %s89, %s92
      %p98 = scmp.eq.s32.totalorder %s11, 0
      %p99 = por %p97, %p98
      %p100 = scmp.ne.s32.totalorder %s89, %s92
      %p101 = scmp.eq.s32.totalorder %s16, 7
      %p102 = por %p100, %p101
      %p103 = scmp.ne.s32.totalorder %s92, %s93
      %p104 = scmp.eq.s32.totalorder %s16, 0
      %p105 = por %p103, %p104
      %p106 = scmp.ne.s32.totalorder %s92, %s93
      %p107 = scmp.eq.s32.totalorder %s17, 7
      %p108 = por %p106, %p107
      %p110 = scmp.ne.s32.totalorder %s93, %s109
      %p111 = scmp.eq.s32.totalorder %s17, 0
      %p112 = por %p110, %p111
      %p113 = scmp.le.s32.totalorder 1, %s11
      %p114 = scmp.lt.s32.totalorder %s11, 9
      %p115 = pnand %p113, %p114
      %p116 = pneg %p115
      // Predicated region
      $region9: #{forward.2} parent=5 // pred_check
        _
      $region10: #{forward.2} parent=5 // pred_check_branch
        %118 = sbr.rel (%p115) target = $region12
      $region11: #{forward.2} parent=5 // pred_region
        %s119 = ssub.s32 %s11, 1
        // Predicated region
        $region13: #{forward.2} parent=11 // pred_check
          %p120 = pneg %p32
        $region14: #{forward.2} parent=11 // pred_check_branch
          %122 = sbr.rel (%p120) target = $region16
        $region15: #{forward.2} parent=11 // pred_region
          %124 = vsyncadd [#allocation3], 0
          %s126 = sshll.u32 %s0, 4
          %s127 = int_to_ptr.vmem [resolvable:$true] %s126
          %129 = dma.vmem_to_smem %s127, 16, [#allocation2], [#allocation3]
        $region16: #{forward.2} parent=11 // pred_fallthru
          _
        // Predicated region
        $region17: #{forward.2} parent=11 // pred_check
          %p130 = pneg %p53
        $region18: #{forward.2} parent=11 // pred_check_branch
          %132 = sbr.rel (%p130) target = $region20
        $region19: #{forward.2} parent=11 // pred_region
          %134 = vsyncadd [#allocation5], 0
          %s136 = sshll.u32 %s1, 4
          %s137 = int_to_ptr.vmem [resolvable:$true] %s136
          %139 = dma.vmem_to_smem %s137, 16, [#allocation4], [#allocation5]
        $region20: #{forward.2} parent=11 // pred_fallthru
          _
      $region12: #{forward.2} parent=5 // pred_fallthru
        _
      %p140 = scmp.lt.s32.totalorder %s11, 8
      // Predicated region
      $region21: #{forward.2} parent=5 // pred_check
        %p141 = pneg %p140
      $region22: #{forward.2} parent=5 // pred_check_branch
        %143 = sbr.rel (%p141) target = $region24
      $region23: #{forward.2} parent=5 // pred_region
        // Predicated region
        $region25: #{forward.2} parent=23 // pred_check
          %p144 = pneg %p73
        $region26: #{forward.2} parent=23 // pred_check_branch
          %146 = sbr.rel (%p144) target = $region28
        $region27: #{forward.2} parent=23 // pred_region
          %p147 = scmp.lt.s32.totalorder %s11, 7
          %s148 = scalar_select %p147, %s11, 7
          %s149 = smul.addr %s148, 8
          %s150 = smul.addr %s149, 4
          %s151 = scalar_lea.vmem %s2, %s150
        $region28: #{forward.2} parent=23 // pred_fallthru
          _
      $region24: #{forward.2} parent=5 // pred_fallthru
        _
      %p152 = scmp.le.s32.totalorder 1, %s11
      %p153 = scmp.lt.s32.totalorder %s11, 9
      %p154 = pnand %p152, %p153
      %p155 = pneg %p154
      // Predicated region
      $region29: #{forward.2} parent=5 // pred_check
        _
      $region30: #{forward.2} parent=5 // pred_check_branch
        %157 = sbr.rel (%p154) target = $region32
      $region31: #{forward.2} parent=5 // pred_region
        %s158 = ssub.s32 %s11, 1
        // Predicated region
        $region33: #{forward.2} parent=31 // pred_check
          %p159 = pneg %p32
        $region34: #{forward.2} parent=31 // pred_check_branch
          %161 = sbr.rel (%p159) target = $region36
        $region35: #{forward.2} parent=31 // pred_region
          %163 = dma.done [#allocation3], 16
        $region36: #{forward.2} parent=31 // pred_fallthru
          _
        // Predicated region
        $region37: #{forward.2} parent=31 // pred_check
          %p164 = pneg %p53
        $region38: #{forward.2} parent=31 // pred_check_branch
          %166 = sbr.rel (%p164) target = $region40
        $region39: #{forward.2} parent=31 // pred_region
          %168 = dma.done [#allocation5], 16
        $region40: #{forward.2} parent=31 // pred_fallthru
          _
        %169 = sfence
        %p170 = pneg %p32
        %p171 = pneg %p29
        %p172 = pneg %p53
        %p173 = pneg %p50
        %p174 = scmp.lt.s32.totalorder %s16, 7
        %s175 = scalar_select %p174, %s16, 7
        %s176 = smul.addr %s175, 8
        %s177 = smul.addr %s176, 4
        %s178 = scalar_lea.vmem %s2, %s177
        %p179 = pneg %p79
        %p180 = pneg %p76
        %p181 = pneg %p105
        %p182 = pneg %p102
        %p183 = scmp.lt.s32.totalorder %s16, 7
        %s184 = scalar_select %p183, %s16, 7
        %s185 = smul.addr %s184, 8
        %s186 = smul.addr %s185, 4
        %s187 = scalar_lea.vmem %s3, %s186
        %p188 = scmp.lt.s32.totalorder %s16, 7
        %s189 = scalar_select %p188, %s16, 7
        %s190 = smul.addr %s189, 8
        %s191 = smul.addr %s190, 4
        %s192 = scalar_lea.vmem %s2, %s191
        %p193 = scmp.lt.s32.totalorder %s16, 7
        %s194 = scalar_select %p193, %s16, 7
        %s195 = smul.addr %s194, 8
        %s196 = smul.addr %s195, 4
        %s197 = scalar_lea.vmem %s3, %s196
        %v198 = vld [vmem:[%s192] ss:$4 sm:$0xff]
        %s199 = sld [smem:[#allocation2]]
        %v200 = vstv %s199
        %v201 = vsub.f32 %v198, %v200
        %s202 = sld [smem:[#allocation4]]
        %v203 = vstv %s202
        %v204 = vmul.f32 %v201, %v203
        %205 = vst [vmem:[%s197] ss:$4 sm:$0xff] %v204
        %s206 = scalar_lea.vmem %s192, 1
        %v207 = vld [vmem:[%s206] ss:$4 sm:$0xff]
        %s208 = sld [smem:[#allocation2 + $0x1]]
        %v209 = vstv %s208
        %v210 = vsub.f32 %v207, %v209
        %s211 = sld [smem:[#allocation4 + $0x1]]
        %v212 = vstv %s211
        %v213 = vmul.f32 %v210, %v212
        %s214 = scalar_lea.vmem %s197, 1
        %215 = vst [vmem:[%s214] ss:$4 sm:$0xff] %v213
        %s216 = scalar_lea.vmem %s192, 2
        %v217 = vld [vmem:[%s216] ss:$4 sm:$0xff]
        %s218 = sld [smem:[#allocation2 + $0x2]]
        %v219 = vstv %s218
        %v220 = vsub.f32 %v217, %v219
        %s221 = sld [smem:[#allocation4 + $0x2]]
        %v222 = vstv %s221
        %v223 = vmul.f32 %v220, %v222
        %s224 = scalar_lea.vmem %s197, 2
        %225 = vst [vmem:[%s224] ss:$4 sm:$0xff] %v223
        %p226 = scmp.lt.s32.totalorder %s16, 7
        %s227 = scalar_select %p226, %s16, 7
        %s228 = smul.addr %s227, 8
        %s229 = smul.addr %s228, 4
        %s230 = scalar_lea.vmem %s3, %s229
        // Predicated region
        $region41: #{forward.2} parent=31 // pred_check
          %p231 = pneg %p102
        $region42: #{forward.2} parent=31 // pred_check_branch
          %233 = sbr.rel (%p231) target = $region44
        $region43: #{forward.2} parent=31 // pred_region
          _
        $region44: #{forward.2} parent=31 // pred_fallthru
          _
      $region32: #{forward.2} parent=5 // pred_fallthru
        _
      %p234 = scmp.le.s32.totalorder 2, %s11
      // Predicated region
      $region45: #{forward.2} parent=5 // pred_check
        %p235 = pneg %p234
      $region46: #{forward.2} parent=5 // pred_check_branch
        %237 = sbr.rel (%p235) target = $region48
      $region47: #{forward.2} parent=5 // pred_region
        %s238 = ssub.s32 %s11, 2
        // Predicated region
        $region49: #{forward.2} parent=47 // pred_check
          %p239 = pneg %p108
        $region50: #{forward.2} parent=47 // pred_check_branch
          %241 = sbr.rel (%p239) target = $region52
        $region51: #{forward.2} parent=47 // pred_region
          %p242 = scmp.lt.s32.totalorder %s17, 7
          %s243 = scalar_select %p242, %s17, 7
          %s244 = smul.addr %s243, 8
          %s245 = smul.addr %s244, 4
          %s246 = scalar_lea.vmem %s3, %s245
        $region52: #{forward.2} parent=47 // pred_fallthru
          _
      $region48: #{forward.2} parent=5 // pred_fallthru
        _
    $region6: #{forward.2} parent=1 // loop_footer
      %s15 = sadd.s32 1, %s11
    $region7: #{forward.2} parent=1 // loop_footer_branch
      %10 = sbr.rel target = $region3
    $region8: #{forward.2} parent=1 // loop_exit
      _
    %247 = vsyncpa [#allocation3], 1
    %s248 = scalar_lea.sflag [#allocation3], 1
    %249 = vsyncpa %s248, 1
    %250 = vsyncpa [#allocation5], 1

// kernel: forward.3
$region0: #{forward.3}
  #allocation0 [shape = 'u32[]', space=smem, size = 0x4, offset = 0x4, fixed_abs, tag = 'smem constant byte address 0x4 - core index']
  #allocation1 [shape = 'u32[72,128]{1,0:T(1,128)}', space=vmem, size = 0x9000, scoped, tag = 'internal scratch']
  %s0 = inlined_call_operand.vmem [shape: f32[2,24,1024], index: 0, kind: input, shape index: {}]
  %s1 = inlined_call_operand.vmem [shape: f32[32,24], index: 1, kind: input, shape index: {}]
  %s2 = inlined_call_operand.vmem [shape: f32[32,1], index: 2, kind: input, shape index: {}]
  %s3 = inlined_call_operand.vmem [shape: f32[9,32], index: 3, kind: input, shape index: {}]
  %s4 = inlined_call_operand.vmem [shape: f32[9,1], index: 4, kind: input, shape index: {}]
  %s5 = inlined_call_operand.vmem [shape: f32[2,9,1024], index: 5, kind: output, shape index: {0}]
  %s6 = inlined_call_operand.vmem [shape: s32[2,1,1024], index: 6, kind: output, shape index: {1}]
  %s7 = inlined_call_operand.vmem [shape: f32[2,4,1], index: 7, kind: output, shape index: {2}]
  %8 = xla_tuple %s5, %s6, %s7
  %s9 = sld [smem:[#allocation0]]
  $region69: #{forward.3} parent=0
    _
  %s11 = ssub.s32 1, %s9
  %s12 = scalar_select 0, %s11, %s9
  loop: start=0, step=1, limit=4
  $region2: #{forward.3} parent=0 // loop_pre_header
    _
  $region3: #{forward.3} parent=0 // loop_header
    %s14 = sphi 0, %s18
    %p15 = scmp.ge.s32.totalorder %s14, 4
    %s24 = sphi 0, %s26
    %s27 = sphi 0, %s24
    %s28 = sphi 0, %s27
    %s44 = sphi 0, %s28
    %s48 = sphi 0, %s48
    %s50 = sphi 0, %s48
    %s51 = sphi 0, %s50
    %s65 = sphi 0, %s51
    %s69 = sphi 0, %s69
    %s71 = sphi 0, %s69
    %s72 = sphi 0, %s71
    %s86 = sphi 0, %s72
    %s90 = sphi 0, %s90
    %s92 = sphi 0, %s90
    %s93 = sphi 0, %s92
    %s107 = sphi 0, %s93
    %s111 = sphi 0, %s111
    %s113 = sphi 0, %s111
    %s114 = sphi 0, %s113
    %s128 = sphi 0, %s114
    %s134 = sphi 0, %s136
    %s137 = sphi 0, %s134
    %s138 = sphi 0, %s137
    %s154 = sphi 0, %s138
    %s160 = sphi 0, %s162
    %s163 = sphi 0, %s160
    %s164 = sphi 0, %s163
    %s180 = sphi 0, %s164
    %s186 = sphi 0, %s188
    %s189 = sphi 0, %s186
    %s190 = sphi 0, %s189
    %s206 = sphi 0, %s190
  $region4: #{forward.3} parent=0 // loop_header_branch
    %17 = sbr.rel (%p15) target = $region8
  $region5: #{forward.3} parent=0 // loop_body
    %s19 = ssub.s32 %s14, 1
    %s20 = ssub.s32 %s14, 2
    %s21 = sadd.s32 %s14, 1
    %s22 = ssub.s32 %s14, %s21
    %p23 = scmp.eq.s32.totalorder %s22, 0
    %s25 = sadd.s32 %s24, 1
    %s26 = scalar_select %p23, %s24, %s25
    %p29 = pneg %p23
    %p30 = scmp.eq.s32.totalorder %s14, 1
    %p31 = por %p29, %p30
    %p32 = scmp.ne.s32.totalorder %s24, %s27
    %p33 = scmp.eq.s32.totalorder %s14, 0
    %p34 = por %p32, %p33
    %p35 = scmp.ne.s32.totalorder %s24, %s27
    %p36 = scmp.eq.s32.totalorder %s19, 1
    %p37 = por %p35, %p36
    %p38 = scmp.ne.s32.totalorder %s27, %s28
    %p39 = scmp.eq.s32.totalorder %s19, 0
    %p40 = por %p38, %p39
    %p41 = scmp.ne.s32.totalorder %s27, %s28
    %p42 = scmp.eq.s32.totalorder %s20, 1
    %p43 = por %p41, %p42
    %p45 = scmp.ne.s32.totalorder %s28, %s44
    %p46 = scmp.eq.s32.totalorder %s20, 0
    %p47 = por %p45, %p46
    %s49 = sadd.s32 %s48, 1
    %p52 = scmp.eq.s32.totalorder %s14, 1
    %p53 = scmp.ne.s32.totalorder %s48, %s50
    %p54 = scmp.eq.s32.totalorder %s14, 0
    %p55 = por %p53, %p54
    %p56 = scmp.ne.s32.totalorder %s48, %s50
    %p57 = scmp.eq.s32.totalorder %s19, 1
    %p58 = por %p56, %p57
    %p59 = scmp.ne.s32.totalorder %s50, %s51
    %p60 = scmp.eq.s32.totalorder %s19, 0
    %p61 = por %p59, %p60
    %p62 = scmp.ne.s32.totalorder %s50, %s51
    %p63 = scmp.eq.s32.totalorder %s20, 1
    %p64 = por %p62, %p63
    %p66 = scmp.ne.s32.totalorder %s51, %s65
    %p67 = scmp.eq.s32.totalorder %s20, 0
    %p68 = por %p66, %p67
    %s70 = sadd.s32 %s69, 1
    %p73 = scmp.eq.s32.totalorder %s14, 1
    %p74 = scmp.ne.s32.totalorder %s69, %s71
    %p75 = scmp.eq.s32.totalorder %s14, 0
    %p76 = por %p74, %p75
    %p77 = scmp.ne.s32.totalorder %s69, %s71
    %p78 = scmp.eq.s32.totalorder %s19, 1
    %p79 = por %p77, %p78
    %p80 = scmp.ne.s32.totalorder %s71, %s72
    %p81 = scmp.eq.s32.totalorder %s19, 0
    %p82 = por %p80, %p81
    %p83 = scmp.ne.s32.totalorder %s71, %s72
    %p84 = scmp.eq.s32.totalorder %s20, 1
    %p85 = por %p83, %p84
    %p87 = scmp.ne.s32.totalorder %s72, %s86
    %p88 = scmp.eq.s32.totalorder %s20, 0
    %p89 = por %p87, %p88
    %s91 = sadd.s32 %s90, 1
    %p94 = scmp.eq.s32.totalorder %s14, 1
    %p95 = scmp.ne.s32.totalorder %s90, %s92
    %p96 = scmp.eq.s32.totalorder %s14, 0
    %p97 = por %p95, %p96
    %p98 = scmp.ne.s32.totalorder %s90, %s92
    %p99 = scmp.eq.s32.totalorder %s19, 1
    %p100 = por %p98, %p99
    %p101 = scmp.ne.s32.totalorder %s92, %s93
    %p102 = scmp.eq.s32.totalorder %s19, 0
    %p103 = por %p101, %p102
    %p104 = scmp.ne.s32.totalorder %s92, %s93
    %p105 = scmp.eq.s32.totalorder %s20, 1
    %p106 = por %p104, %p105
    %p108 = scmp.ne.s32.totalorder %s93, %s107
    %p109 = scmp.eq.s32.totalorder %s20, 0
    %p110 = por %p108, %p109
    %s112 = sadd.s32 %s111, 1
    %p115 = scmp.eq.s32.totalorder %s14, 1
    %p116 = scmp.ne.s32.totalorder %s111, %s113
    %p117 = scmp.eq.s32.totalorder %s14, 0
    %p118 = por %p116, %p117
    %p119 = scmp.ne.s32.totalorder %s111, %s113
    %p120 = scmp.eq.s32.totalorder %s19, 1
    %p121 = por %p119, %p120
    %p122 = scmp.ne.s32.totalorder %s113, %s114
    %p123 = scmp.eq.s32.totalorder %s19, 0
    %p124 = por %p122, %p123
    %p125 = scmp.ne.s32.totalorder %s113, %s114
    %p126 = scmp.eq.s32.totalorder %s20, 1
    %p127 = por %p125, %p126
    %p129 = scmp.ne.s32.totalorder %s114, %s128
    %p130 = scmp.eq.s32.totalorder %s20, 0
    %p131 = por %p129, %p130
    %s132 = ssub.s32 %s14, %s21
    %p133 = scmp.eq.s32.totalorder %s132, 0
    %s135 = sadd.s32 %s134, 1
    %s136 = scalar_select %p133, %s134, %s135
    %p139 = pneg %p133
    %p140 = scmp.eq.s32.totalorder %s14, 1
    %p141 = por %p139, %p140
    %p142 = scmp.ne.s32.totalorder %s134, %s137
    %p143 = scmp.eq.s32.totalorder %s14, 0
    %p144 = por %p142, %p143
    %p145 = scmp.ne.s32.totalorder %s134, %s137
    %p146 = scmp.eq.s32.totalorder %s19, 1
    %p147 = por %p145, %p146
    %p148 = scmp.ne.s32.totalorder %s137, %s138
    %p149 = scmp.eq.s32.totalorder %s19, 0
    %p150 = por %p148, %p149
    %p151 = scmp.ne.s32.totalorder %s137, %s138
    %p152 = scmp.eq.s32.totalorder %s20, 1
    %p153 = por %p151, %p152
    %p155 = scmp.ne.s32.totalorder %s138, %s154
    %p156 = scmp.eq.s32.totalorder %s20, 0
    %p157 = por %p155, %p156
    %s158 = ssub.s32 %s14, %s21
    %p159 = scmp.eq.s32.totalorder %s158, 0
    %s161 = sadd.s32 %s160, 1
    %s162 = scalar_select %p159, %s160, %s161
    %p165 = pneg %p159
    %p166 = scmp.eq.s32.totalorder %s14, 1
    %p167 = por %p165, %p166
    %p168 = scmp.ne.s32.totalorder %s160, %s163
    %p169 = scmp.eq.s32.totalorder %s14, 0
    %p170 = por %p168, %p169
    %p171 = scmp.ne.s32.totalorder %s160, %s163
    %p172 = scmp.eq.s32.totalorder %s19, 1
    %p173 = por %p171, %p172
    %p174 = scmp.ne.s32.totalorder %s163, %s164
    %p175 = scmp.eq.s32.totalorder %s19, 0
    %p176 = por %p174, %p175
    %p177 = scmp.ne.s32.totalorder %s163, %s164
    %p178 = scmp.eq.s32.totalorder %s20, 1
    %p179 = por %p177, %p178
    %p181 = scmp.ne.s32.totalorder %s164, %s180
    %p182 = scmp.eq.s32.totalorder %s20, 0
    %p183 = por %p181, %p182
    %s184 = ssub.s32 %s14, %s21
    %p185 = scmp.eq.s32.totalorder %s184, 0
    %s187 = sadd.s32 %s186, 1
    %s188 = scalar_select %p185, %s186, %s187
    %p191 = pneg %p185
    %p192 = scmp.eq.s32.totalorder %s14, 1
    %p193 = por %p191, %p192
    %p194 = scmp.ne.s32.totalorder %s186, %s189
    %p195 = scmp.eq.s32.totalorder %s14, 0
    %p196 = por %p194, %p195
    %p197 = scmp.ne.s32.totalorder %s186, %s189
    %p198 = scmp.eq.s32.totalorder %s19, 1
    %p199 = por %p197, %p198
    %p200 = scmp.ne.s32.totalorder %s189, %s190
    %p201 = scmp.eq.s32.totalorder %s19, 0
    %p202 = por %p200, %p201
    %p203 = scmp.ne.s32.totalorder %s189, %s190
    %p204 = scmp.eq.s32.totalorder %s20, 1
    %p205 = por %p203, %p204
    %p207 = scmp.ne.s32.totalorder %s190, %s206
    %p208 = scmp.eq.s32.totalorder %s20, 0
    %p209 = por %p207, %p208
    %p210 = scmp.le.s32.totalorder 1, %s14
    %p211 = scmp.lt.s32.totalorder %s14, 3
    %p212 = pnand %p210, %p211
    %p213 = pneg %p212
    // Predicated region
    $region9: #{forward.3} parent=5 // pred_check
      _
    $region10: #{forward.3} parent=5 // pred_check_branch
      %215 = sbr.rel (%p212) target = $region12
    $region11: #{forward.3} parent=5 // pred_region
      %s216 = ssub.s32 %s14, 1
      // Predicated region
      $region13: #{forward.3} parent=11 // pred_check
        %p217 = pneg %p61
      $region14: #{forward.3} parent=11 // pred_check_branch
        %219 = sbr.rel (%p217) target = $region16
      $region15: #{forward.3} parent=11 // pred_region
        _
      $region16: #{forward.3} parent=11 // pred_fallthru
        _
      // Predicated region
      $region17: #{forward.3} parent=11 // pred_check
        %p220 = pneg %p82
      $region18: #{forward.3} parent=11 // pred_check_branch
        %222 = sbr.rel (%p220) target = $region20
      $region19: #{forward.3} parent=11 // pred_region
        _
      $region20: #{forward.3} parent=11 // pred_fallthru
        _
      // Predicated region
      $region21: #{forward.3} parent=11 // pred_check
        %p223 = pneg %p103
      $region22: #{forward.3} parent=11 // pred_check_branch
        %225 = sbr.rel (%p223) target = $region24
      $region23: #{forward.3} parent=11 // pred_region
        _
      $region24: #{forward.3} parent=11 // pred_fallthru
        _
      // Predicated region
      $region25: #{forward.3} parent=11 // pred_check
        %p226 = pneg %p124
      $region26: #{forward.3} parent=11 // pred_check_branch
        %228 = sbr.rel (%p226) target = $region28
      $region27: #{forward.3} parent=11 // pred_region
        _
      $region28: #{forward.3} parent=11 // pred_fallthru
        _
    $region12: #{forward.3} parent=5 // pred_fallthru
      _
    %p229 = scmp.lt.s32.totalorder %s14, 2
    // Predicated region
    $region29: #{forward.3} parent=5 // pred_check
      %p230 = pneg %p229
    $region30: #{forward.3} parent=5 // pred_check_branch
      %232 = sbr.rel (%p230) target = $region32
    $region31: #{forward.3} parent=5 // pred_region
      // Predicated region
      $region33: #{forward.3} parent=31 // pred_check
        %p233 = pneg %p34
      $region34: #{forward.3} parent=31 // pred_check_branch
        %235 = sbr.rel (%p233) target = $region36
      $region35: #{forward.3} parent=31 // pred_region
        %p236 = scmp.lt.s32.totalorder %s14, 1
        %s237 = scalar_select %p236, %s14, 1
        %s238 = smul.addr %s237, 24
        %s239 = smul.addr %s238, 8
        %s240 = scalar_lea.vmem %s0, %s239
      $region36: #{forward.3} parent=31 // pred_fallthru
        _
    $region32: #{forward.3} parent=5 // pred_fallthru
      _
    %p241 = scmp.le.s32.totalorder 1, %s14
    %p242 = scmp.lt.s32.totalorder %s14, 3
    %p243 = pnand %p241, %p242
    %p244 = pneg %p243
    // Predicated region
    $region37: #{forward.3} parent=5 // pred_check
      _
    $region38: #{forward.3} parent=5 // pred_check_branch
      %246 = sbr.rel (%p243) target = $region40
    $region39: #{forward.3} parent=5 // pred_region
      %s247 = ssub.s32 %s14, 1
      %p248 = scmp.lt.s32.totalorder %s19, 1
      %s249 = scalar_select %p248, %s19, 1
      %s250 = smul.addr %s249, 24
      %s251 = smul.addr %s250, 8
      %s252 = scalar_lea.vmem %s0, %s251
      %p253 = pneg %p40
      %p254 = pneg %p37
      %p255 = pneg %p61
      %p256 = pneg %p58
      %p257 = pneg %p82
      %p258 = pneg %p79
      %p259 = pneg %p103
      %p260 = pneg %p100
      %p261 = pneg %p124
      %p262 = pneg %p121
      %p263 = pneg %p150
      %p264 = pneg %p147
      %p265 = scmp.lt.s32.totalorder %s19, 1
      %s266 = scalar_select %p265, %s19, 1
      %s267 = smul.addr %s266, 16
      %s268 = smul.addr %s267, 8
      %s269 = scalar_lea.vmem %s5, %s268
      %p270 = pneg %p176
      %p271 = pneg %p173
      %p272 = scmp.lt.s32.totalorder %s19, 1
      %s273 = scalar_select %p272, %s19, 1
      %s274 = smul.addr %s273, 8
      %s275 = scalar_lea.vmem %s6, %s274
      %p276 = pneg %p202
      %p277 = pneg %p199
      %p278 = scmp.lt.s32.totalorder %s19, 1
      %s279 = scalar_select %p278, %s19, 1
      %s280 = smul.addr %s279, 4
      %s281 = scalar_lea.vmem %s7, %s280
      %p282 = scmp.lt.s32.totalorder %s19, 1
      %s283 = scalar_select %p282, %s19, 1
      %s284 = smul.addr %s283, 24
      %s285 = smul.addr %s284, 8
      %s286 = scalar_lea.vmem %s0, %s285
      %p287 = scmp.lt.s32.totalorder %s19, 1
      %s288 = scalar_select %p287, %s19, 1
      %s289 = smul.addr %s288, 16
      %s290 = smul.addr %s289, 8
      %s291 = scalar_lea.vmem %s5, %s290
      %p292 = scmp.lt.s32.totalorder %s19, 1
      %s293 = scalar_select %p292, %s19, 1
      %s294 = smul.addr %s293, 8
      %s295 = scalar_lea.vmem %s6, %s294
      %p296 = scmp.lt.s32.totalorder %s19, 1
      %s297 = scalar_select %p296, %s19, 1
      %s298 = smul.addr %s297, 4
      %s299 = scalar_lea.vmem %s7, %s298
      %v300 = vld [vmem:[%s1] sm:$0xff]
      %v301 = vld [vmem:[%s1 + $0x8] sm:$0xff]
      %v302 = vld [vmem:[%s1 + $0x10] sm:$0xff]
      %v303 = vld [vmem:[%s1 + $0x18] sm:$0xff]
      %v304 = vld [vmem:[%s2] sm:$0xff]
      %v305 = vld [vmem:[%s2 + $0x8] sm:$0xff]
      %v306 = vld [vmem:[%s2 + $0x10] sm:$0xff]
      %v307 = vld [vmem:[%s2 + $0x18] sm:$0xff]
      %v308 = vld [vmem:[%s3] sm:$0xff]
      %v309 = vld [vmem:[%s3 + $0x8] sm:$0x1]
      %v310 = vld [vmem:[%s4] sm:$0xff]
      %v311 = vld [vmem:[%s4 + $0x8] sm:$0x1]
      %v312 = vld [vmem:[%s286] sm:$0xff]
      %v313 = vld [vmem:[%s286 + $0x8] sm:$0xff]
      %v314 = vld [vmem:[%s286 + $0x10] sm:$0xff]
      %v315 = vld [vmem:[%s286 + $0x18] sm:$0xff]
      %v316 = vld [vmem:[%s286 + $0x20] sm:$0xff]
      %v317 = vld [vmem:[%s286 + $0x28] sm:$0xff]
      %v318 = vld [vmem:[%s286 + $0x30] sm:$0xff]
      %v319 = vld [vmem:[%s286 + $0x38] sm:$0xff]
      %v320 = vld [vmem:[%s286 + $0x40] sm:$0xff]
      %v321 = vld [vmem:[%s286 + $0x48] sm:$0xff]
      %v322 = vld [vmem:[%s286 + $0x50] sm:$0xff]
      %v323 = vld [vmem:[%s286 + $0x58] sm:$0xff]
      %v324 = vld [vmem:[%s286 + $0x60] sm:$0xff]
      %v325 = vld [vmem:[%s286 + $0x68] sm:$0xff]
      %v326 = vld [vmem:[%s286 + $0x70] sm:$0xff]
      %v327 = vld [vmem:[%s286 + $0x78] sm:$0xff]
      %v328 = vld [vmem:[%s286 + $0x80] sm:$0xff]
      %v329 = vld [vmem:[%s286 + $0x88] sm:$0xff]
      %v330 = vld [vmem:[%s286 + $0x90] sm:$0xff]
      %v331 = vld [vmem:[%s286 + $0x98] sm:$0xff]
      %v332 = vld [vmem:[%s286 + $0xa0] sm:$0xff]
      %v333 = vld [vmem:[%s286 + $0xa8] sm:$0xff]
      %v334 = vld [vmem:[%s286 + $0xb0] sm:$0xff]
      %v335 = vld [vmem:[%s286 + $0xb8] sm:$0xff]
      %337 = vset.pattern.permute.xlu0 0
      %338 = vperm.xlu0 %337, %v304
      %v339 = vpop.permute.xlu0 %338
      %342 = vset.pattern.permute.xlu0 0
      %343 = vperm.xlu0 %342, %v305
      %v344 = vpop.permute.xlu0 %343
      %347 = vset.pattern.permute.xlu0 0
      %348 = vperm.xlu0 %347, %v306
      %v349 = vpop.permute.xlu0 %348
      %352 = vset.pattern.permute.xlu0 0
      %353 = vperm.xlu0 %352, %v307
      %v354 = vpop.permute.xlu0 %353
      %vm356 = vcmask 195584
      %v358 = vsel %vm356, %v300, 0
      %v361 = vsel %vm356, %v301, 0
      %v364 = vsel %vm356, %v302, 0
      %v367 = vsel %vm356, %v303, 0
      %369 = vmatpush.msra.mxu0 0.0
      %370 = vmatpush.msra.mxu0 0.0
      %371 = vmatpush.msra.mxu0 0.0
      %372 = vmatpush.msra.mxu0 0.0
      %373 = vmatpush.msra.mxu0 0.0
      %374 = vmatpush.msra.mxu0 0.0
      %375 = vmatpush.msra.mxu0 0.0
      %376 = vmatpush.msra.mxu0 0.0
      %377 = vmatpush.msra.mxu0 0.0
      %378 = vmatpush.msra.mxu0 0.0
      %379 = vmatpush.msra.mxu0 0.0
      %380 = vmatpush.msra.mxu0 0.0
      %381 = vmatpush.msra.mxu0 0.0
      %382 = vmatpush.msra.mxu0 %v328
      %383 = vmatpush.msra.mxu0 %v320
      %384 = vmatpush.msra.mxu0 %v312
      %385 = vmatmul.f32.gmra.mxu0 %v358
      %v386 = vpop.f32.mrf.mxu0
      %v387 = vadd.f32 %v339, %v386
      %388 = vmatmul.f32.gmra.mxu0 %v361
      %v389 = vpop.f32.mrf.mxu0
      %v390 = vadd.f32 %v344, %v389
      %391 = vmatmul.f32.gmra.mxu0 %v364
      %v392 = vpop.f32.mrf.mxu0
      %v393 = vadd.f32 %v349, %v392
      %394 = vmatmul.f32.gmra.mxu0 %v367
      %v395 = vpop.f32.mrf.mxu0
      %v396 = vadd.f32 %v354, %v395
      %397 = vdwg.mxu0
      %398 = vmatpush.msra.mxu0 0.0
      %399 = vmatpush.msra.mxu0 0.0
      %400 = vmatpush.msra.mxu0 0.0
      %401 = vmatpush.msra.mxu0 0.0
      %402 = vmatpush.msra.mxu0 0.0
      %403 = vmatpush.msra.mxu0 0.0
      %404 = vmatpush.msra.mxu0 0.0
      %405 = vmatpush.msra.mxu0 0.0
      %406 = vmatpush.msra.mxu0 0.0
      %407 = vmatpush.msra.mxu0 0.0
      %408 = vmatpush.msra.mxu0 0.0
      %409 = vmatpush.msra.mxu0 0.0
      %410 = vmatpush.msra.mxu0 0.0
      %411 = vmatpush.msra.mxu0 %v329
      %412 = vmatpush.msra.mxu0 %v321
      %413 = vmatpush.msra.mxu0 %v313
      %414 = vmatmul.f32.gmra.mxu0 %v358
      %v415 = vpop.f32.mrf.mxu0
      %v416 = vadd.f32 %v339, %v415
      %417 = vmatmul.f32.gmra.mxu0 %v361
      %v418 = vpop.f32.mrf.mxu0
      %v419 = vadd.f32 %v344, %v418
      %420 = vmatmul.f32.gmra.mxu0 %v364
      %v421 = vpop.f32.mrf.mxu0
      %v422 = vadd.f32 %v349, %v421
      %423 = vmatmul.f32.gmra.mxu0 %v367
      %v424 = vpop.f32.mrf.mxu0
      %v425 = vadd.f32 %v354, %v424
      %426 = vdwg.mxu0
      %427 = vmatpush.msra.mxu0 0.0
      %428 = vmatpush.msra.mxu0 0.0
      %429 = vmatpush.msra.mxu0 0.0
      %430 = vmatpush.msra.mxu0 0.0
      %431 = vmatpush.msra.mxu0 0.0
      %432 = vmatpush.msra.mxu0 0.0
      %433 = vmatpush.msra.mxu0 0.0
      %434 = vmatpush.msra.mxu0 0.0
      %435 = vmatpush.msra.mxu0 0.0
      %436 = vmatpush.msra.mxu0 0.0
      %437 = vmatpush.msra.mxu0 0.0
      %438 = vmatpush.msra.mxu0 0.0
      %439 = vmatpush.msra.mxu0 0.0
      %440 = vmatpush.msra.mxu0 %v330
      %441 = vmatpush.msra.mxu0 %v322
      %442 = vmatpush.msra.mxu0 %v314
      %443 = vmatmul.f32.gmra.mxu0 %v358
      %v444 = vpop.f32.mrf.mxu0
      %v445 = vadd.f32 %v339, %v444
      %446 = vmatmul.f32.gmra.mxu0 %v361
      %v447 = vpop.f32.mrf.mxu0
      %v448 = vadd.f32 %v344, %v447
      %449 = vmatmul.f32.gmra.mxu0 %v364
      %v450 = vpop.f32.mrf.mxu0
      %v451 = vadd.f32 %v349, %v450
      %452 = vmatmul.f32.gmra.mxu0 %v367
      %v453 = vpop.f32.mrf.mxu0
      %v454 = vadd.f32 %v354, %v453
      %455 = vdwg.mxu0
      %456 = vmatpush.msra.mxu0 0.0
      %457 = vmatpush.msra.mxu0 0.0
      %458 = vmatpush.msra.mxu0 0.0
      %459 = vmatpush.msra.mxu0 0.0
      %460 = vmatpush.msra.mxu0 0.0
      %461 = vmatpush.msra.mxu0 0.0
      %462 = vmatpush.msra.mxu0 0.0
      %463 = vmatpush.msra.mxu0 0.0
      %464 = vmatpush.msra.mxu0 0.0
      %465 = vmatpush.msra.mxu0 0.0
      %466 = vmatpush.msra.mxu0 0.0
      %467 = vmatpush.msra.mxu0 0.0
      %468 = vmatpush.msra.mxu0 0.0
      %469 = vmatpush.msra.mxu0 %v331
      %470 = vmatpush.msra.mxu0 %v323
      %471 = vmatpush.msra.mxu0 %v315
      %472 = vmatmul.f32.gmra.mxu0 %v358
      %v473 = vpop.f32.mrf.mxu0
      %v474 = vadd.f32 %v339, %v473
      %475 = vmatmul.f32.gmra.mxu0 %v361
      %v476 = vpop.f32.mrf.mxu0
      %v477 = vadd.f32 %v344, %v476
      %478 = vmatmul.f32.gmra.mxu0 %v364
      %v479 = vpop.f32.mrf.mxu0
      %v480 = vadd.f32 %v349, %v479
      %481 = vmatmul.f32.gmra.mxu0 %v367
      %v482 = vpop.f32.mrf.mxu0
      %v483 = vadd.f32 %v354, %v482
      %484 = vdwg.mxu0
      %485 = vmatpush.msra.mxu0 0.0
      %486 = vmatpush.msra.mxu0 0.0
      %487 = vmatpush.msra.mxu0 0.0
      %488 = vmatpush.msra.mxu0 0.0
      %489 = vmatpush.msra.mxu0 0.0
      %490 = vmatpush.msra.mxu0 0.0
      %491 = vmatpush.msra.mxu0 0.0
      %492 = vmatpush.msra.mxu0 0.0
      %493 = vmatpush.msra.mxu0 0.0
      %494 = vmatpush.msra.mxu0 0.0
      %495 = vmatpush.msra.mxu0 0.0
      %496 = vmatpush.msra.mxu0 0.0
      %497 = vmatpush.msra.mxu0 0.0
      %498 = vmatpush.msra.mxu0 %v332
      %499 = vmatpush.msra.mxu0 %v324
      %500 = vmatpush.msra.mxu0 %v316
      %501 = vmatmul.f32.gmra.mxu0 %v358
      %v502 = vpop.f32.mrf.mxu0
      %v503 = vadd.f32 %v339, %v502
      %504 = vmatmul.f32.gmra.mxu0 %v361
      %v505 = vpop.f32.mrf.mxu0
      %v506 = vadd.f32 %v344, %v505
      %507 = vmatmul.f32.gmra.mxu0 %v364
      %v508 = vpop.f32.mrf.mxu0
      %v509 = vadd.f32 %v349, %v508
      %510 = vmatmul.f32.gmra.mxu0 %v367
      %v511 = vpop.f32.mrf.mxu0
      %v512 = vadd.f32 %v354, %v511
      %513 = vdwg.mxu0
      %514 = vmatpush.msra.mxu0 0.0
      %515 = vmatpush.msra.mxu0 0.0
      %516 = vmatpush.msra.mxu0 0.0
      %517 = vmatpush.msra.mxu0 0.0
      %518 = vmatpush.msra.mxu0 0.0
      %519 = vmatpush.msra.mxu0 0.0
      %520 = vmatpush.msra.mxu0 0.0
      %521 = vmatpush.msra.mxu0 0.0
      %522 = vmatpush.msra.mxu0 0.0
      %523 = vmatpush.msra.mxu0 0.0
      %524 = vmatpush.msra.mxu0 0.0
      %525 = vmatpush.msra.mxu0 0.0
      %526 = vmatpush.msra.mxu0 0.0
      %527 = vmatpush.msra.mxu0 %v333
      %528 = vmatpush.msra.mxu0 %v325
      %529 = vmatpush.msra.mxu0 %v317
      %530 = vmatmul.f32.gmra.mxu0 %v358
      %v531 = vpop.f32.mrf.mxu0
      %v532 = vadd.f32 %v339, %v531
      %533 = vmatmul.f32.gmra.mxu0 %v361
      %v534 = vpop.f32.mrf.mxu0
      %v535 = vadd.f32 %v344, %v534
      %536 = vmatmul.f32.gmra.mxu0 %v364
      %v537 = vpop.f32.mrf.mxu0
      %v538 = vadd.f32 %v349, %v537
      %539 = vmatmul.f32.gmra.mxu0 %v367
      %v540 = vpop.f32.mrf.mxu0
      %v541 = vadd.f32 %v354, %v540
      %542 = vdwg.mxu0
      %543 = vmatpush.msra.mxu0 0.0
      %544 = vmatpush.msra.mxu0 0.0
      %545 = vmatpush.msra.mxu0 0.0
      %546 = vmatpush.msra.mxu0 0.0
      %547 = vmatpush.msra.mxu0 0.0
      %548 = vmatpush.msra.mxu0 0.0
      %549 = vmatpush.msra.mxu0 0.0
      %550 = vmatpush.msra.mxu0 0.0
      %551 = vmatpush.msra.mxu0 0.0
      %552 = vmatpush.msra.mxu0 0.0
      %553 = vmatpush.msra.mxu0 0.0
      %554 = vmatpush.msra.mxu0 0.0
      %555 = vmatpush.msra.mxu0 0.0
      %556 = vmatpush.msra.mxu0 %v334
      %557 = vmatpush.msra.mxu0 %v326
      %558 = vmatpush.msra.mxu0 %v318
      %559 = vmatmul.f32.gmra.mxu0 %v358
      %v560 = vpop.f32.mrf.mxu0
      %v561 = vadd.f32 %v339, %v560
      %562 = vmatmul.f32.gmra.mxu0 %v361
      %v563 = vpop.f32.mrf.mxu0
      %v564 = vadd.f32 %v344, %v563
      %565 = vmatmul.f32.gmra.mxu0 %v364
      %v566 = vpop.f32.mrf.mxu0
      %v567 = vadd.f32 %v349, %v566
      %568 = vmatmul.f32.gmra.mxu0 %v367
      %v569 = vpop.f32.mrf.mxu0
      %v570 = vadd.f32 %v354, %v569
      %571 = vdwg.mxu0
      %572 = vmatpush.msra.mxu0 0.0
      %573 = vmatpush.msra.mxu0 0.0
      %574 = vmatpush.msra.mxu0 0.0
      %575 = vmatpush.msra.mxu0 0.0
      %576 = vmatpush.msra.mxu0 0.0
      %577 = vmatpush.msra.mxu0 0.0
      %578 = vmatpush.msra.mxu0 0.0
      %579 = vmatpush.msra.mxu0 0.0
      %580 = vmatpush.msra.mxu0 0.0
      %581 = vmatpush.msra.mxu0 0.0
      %582 = vmatpush.msra.mxu0 0.0
      %583 = vmatpush.msra.mxu0 0.0
      %584 = vmatpush.msra.mxu0 0.0
      %585 = vmatpush.msra.mxu0 %v335
      %586 = vmatpush.msra.mxu0 %v327
      %587 = vmatpush.msra.mxu0 %v319
      %588 = vmatmul.f32.gmra.mxu0 %v358
      %v589 = vpop.f32.mrf.mxu0
      %v590 = vadd.f32 %v339, %v589
      %591 = vmatmul.f32.gmra.mxu0 %v361
      %v592 = vpop.f32.mrf.mxu0
      %v593 = vadd.f32 %v344, %v592
      %594 = vmatmul.f32.gmra.mxu0 %v364
      %v595 = vpop.f32.mrf.mxu0
      %v596 = vadd.f32 %v349, %v595
      %597 = vmatmul.f32.gmra.mxu0 %v367
      %v598 = vpop.f32.mrf.mxu0
      %v599 = vadd.f32 %v354, %v598
      %600 = vdwg.mxu0
      %v601 = vmax.f32 %v387, 0.0
      %v602 = vmax.f32 %v416, 0.0
      %v603 = vmax.f32 %v445, 0.0
      %v604 = vmax.f32 %v474, 0.0
      %v605 = vmax.f32 %v503, 0.0
      %v606 = vmax.f32 %v532, 0.0
      %v607 = vmax.f32 %v561, 0.0
      %v608 = vmax.f32 %v590, 0.0
      %v609 = vmax.f32 %v390, 0.0
      %v610 = vmax.f32 %v419, 0.0
      %v611 = vmax.f32 %v448, 0.0
      %v612 = vmax.f32 %v477, 0.0
      %v613 = vmax.f32 %v506, 0.0
      %v614 = vmax.f32 %v535, 0.0
      %v615 = vmax.f32 %v564, 0.0
      %v616 = vmax.f32 %v593, 0.0
      %v617 = vmax.f32 %v393, 0.0
      %v618 = vmax.f32 %v422, 0.0
      %v619 = vmax.f32 %v451, 0.0
      %v620 = vmax.f32 %v480, 0.0
      %v621 = vmax.f32 %v509, 0.0
      %v622 = vmax.f32 %v538, 0.0
      %v623 = vmax.f32 %v567, 0.0
      %v624 = vmax.f32 %v596, 0.0
      %v625 = vmax.f32 %v396, 0.0
      %v626 = vmax.f32 %v425, 0.0
      %v627 = vmax.f32 %v454, 0.0
      %v628 = vmax.f32 %v483, 0.0
      %v629 = vmax.f32 %v512, 0.0
      %v630 = vmax.f32 %v541, 0.0
      %v631 = vmax.f32 %v570, 0.0
      %v632 = vmax.f32 %v599, 0.0
      %634 = vset.pattern.permute.xlu0 0
      %635 = vperm.xlu0 %634, %v310
      %v636 = vpop.permute.xlu0 %635
      %639 = vset.pattern.permute.xlu0 0
      %640 = vperm.xlu0 %639, %v311
      %v641 = vpop.permute.xlu0 %640
      %vm643 = vcmask 261120
      %v645 = vsel %vm643, %v308, 0
      %v648 = vsel %vm643, %v309, 0
      %650 = vmatpush.msra.mxu0 0.0
      %651 = vmatpush.msra.mxu0 0.0
      %652 = vmatpush.msra.mxu0 0.0
      %653 = vmatpush.msra.mxu0 0.0
      %654 = vmatpush.msra.mxu0 0.0
      %655 = vmatpush.msra.mxu0 0.0
      %656 = vmatpush.msra.mxu0 0.0
      %657 = vmatpush.msra.mxu0 0.0
      %658 = vmatpush.msra.mxu0 0.0
      %659 = vmatpush.msra.mxu0 0.0
      %660 = vmatpush.msra.mxu0 0.0
      %661 = vmatpush.msra.mxu0 0.0
      %662 = vmatpush.msra.mxu0 %v625
      %663 = vmatpush.msra.mxu0 %v617
      %664 = vmatpush.msra.mxu0 %v609
      %665 = vmatpush.msra.mxu0 %v601
      %666 = vmatmul.f32.gmra.mxu0 %v645
      %v667 = vpop.f32.mrf.mxu0
      %v668 = vadd.f32 %v636, %v667
      %669 = vmatmul.f32.gmra.mxu0 %v648
      %v670 = vpop.f32.mrf.mxu0
      %v671 = vadd.f32 %v641, %v670
      %672 = vdwg.mxu0
      %673 = vmatpush.msra.mxu0 0.0
      %674 = vmatpush.msra.mxu0 0.0
      %675 = vmatpush.msra.mxu0 0.0
      %676 = vmatpush.msra.mxu0 0.0
      %677 = vmatpush.msra.mxu0 0.0
      %678 = vmatpush.msra.mxu0 0.0
      %679 = vmatpush.msra.mxu0 0.0
      %680 = vmatpush.msra.mxu0 0.0
      %681 = vmatpush.msra.mxu0 0.0
      %682 = vmatpush.msra.mxu0 0.0
      %683 = vmatpush.msra.mxu0 0.0
      %684 = vmatpush.msra.mxu0 0.0
      %685 = vmatpush.msra.mxu0 %v626
      %686 = vmatpush.msra.mxu0 %v618
      %687 = vmatpush.msra.mxu0 %v610
      %688 = vmatpush.msra.mxu0 %v602
      %689 = vmatmul.f32.gmra.mxu0 %v645
      %v690 = vpop.f32.mrf.mxu0
      %v691 = vadd.f32 %v636, %v690
      %692 = vmatmul.f32.gmra.mxu0 %v648
      %v693 = vpop.f32.mrf.mxu0
      %v694 = vadd.f32 %v641, %v693
      %695 = vdwg.mxu0
      %696 = vmatpush.msra.mxu0 0.0
      %697 = vmatpush.msra.mxu0 0.0
      %698 = vmatpush.msra.mxu0 0.0
      %699 = vmatpush.msra.mxu0 0.0
      %700 = vmatpush.msra.mxu0 0.0
      %701 = vmatpush.msra.mxu0 0.0
      %702 = vmatpush.msra.mxu0 0.0
      %703 = vmatpush.msra.mxu0 0.0
      %704 = vmatpush.msra.mxu0 0.0
      %705 = vmatpush.msra.mxu0 0.0
      %706 = vmatpush.msra.mxu0 0.0
      %707 = vmatpush.msra.mxu0 0.0
      %708 = vmatpush.msra.mxu0 %v627
      %709 = vmatpush.msra.mxu0 %v619
      %710 = vmatpush.msra.mxu0 %v611
      %711 = vmatpush.msra.mxu0 %v603
      %712 = vmatmul.f32.gmra.mxu0 %v645
      %v713 = vpop.f32.mrf.mxu0
      %v714 = vadd.f32 %v636, %v713
      %715 = vmatmul.f32.gmra.mxu0 %v648
      %v716 = vpop.f32.mrf.mxu0
      %v717 = vadd.f32 %v641, %v716
      %718 = vdwg.mxu0
      %719 = vmatpush.msra.mxu0 0.0
      %720 = vmatpush.msra.mxu0 0.0
      %721 = vmatpush.msra.mxu0 0.0
      %722 = vmatpush.msra.mxu0 0.0
      %723 = vmatpush.msra.mxu0 0.0
      %724 = vmatpush.msra.mxu0 0.0
      %725 = vmatpush.msra.mxu0 0.0
      %726 = vmatpush.msra.mxu0 0.0
      %727 = vmatpush.msra.mxu0 0.0
      %728 = vmatpush.msra.mxu0 0.0
      %729 = vmatpush.msra.mxu0 0.0
      %730 = vmatpush.msra.mxu0 0.0
      %731 = vmatpush.msra.mxu0 %v628
      %732 = vmatpush.msra.mxu0 %v620
      %733 = vmatpush.msra.mxu0 %v612
      %734 = vmatpush.msra.mxu0 %v604
      %735 = vmatmul.f32.gmra.mxu0 %v645
      %v736 = vpop.f32.mrf.mxu0
      %v737 = vadd.f32 %v636, %v736
      %738 = vmatmul.f32.gmra.mxu0 %v648
      %v739 = vpop.f32.mrf.mxu0
      %v740 = vadd.f32 %v641, %v739
      %741 = vdwg.mxu0
      %742 = vmatpush.msra.mxu0 0.0
      %743 = vmatpush.msra.mxu0 0.0
      %744 = vmatpush.msra.mxu0 0.0
      %745 = vmatpush.msra.mxu0 0.0
      %746 = vmatpush.msra.mxu0 0.0
      %747 = vmatpush.msra.mxu0 0.0
      %748 = vmatpush.msra.mxu0 0.0
      %749 = vmatpush.msra.mxu0 0.0
      %750 = vmatpush.msra.mxu0 0.0
      %751 = vmatpush.msra.mxu0 0.0
      %752 = vmatpush.msra.mxu0 0.0
      %753 = vmatpush.msra.mxu0 0.0
      %754 = vmatpush.msra.mxu0 %v629
      %755 = vmatpush.msra.mxu0 %v621
      %756 = vmatpush.msra.mxu0 %v613
      %757 = vmatpush.msra.mxu0 %v605
      %758 = vmatmul.f32.gmra.mxu0 %v645
      %v759 = vpop.f32.mrf.mxu0
      %v760 = vadd.f32 %v636, %v759
      %761 = vmatmul.f32.gmra.mxu0 %v648
      %v762 = vpop.f32.mrf.mxu0
      %v763 = vadd.f32 %v641, %v762
      %764 = vdwg.mxu0
      %765 = vmatpush.msra.mxu0 0.0
      %766 = vmatpush.msra.mxu0 0.0
      %767 = vmatpush.msra.mxu0 0.0
      %768 = vmatpush.msra.mxu0 0.0
      %769 = vmatpush.msra.mxu0 0.0
      %770 = vmatpush.msra.mxu0 0.0
      %771 = vmatpush.msra.mxu0 0.0
      %772 = vmatpush.msra.mxu0 0.0
      %773 = vmatpush.msra.mxu0 0.0
      %774 = vmatpush.msra.mxu0 0.0
      %775 = vmatpush.msra.mxu0 0.0
      %776 = vmatpush.msra.mxu0 0.0
      %777 = vmatpush.msra.mxu0 %v630
      %778 = vmatpush.msra.mxu0 %v622
      %779 = vmatpush.msra.mxu0 %v614
      %780 = vmatpush.msra.mxu0 %v606
      %781 = vmatmul.f32.gmra.mxu0 %v645
      %v782 = vpop.f32.mrf.mxu0
      %v783 = vadd.f32 %v636, %v782
      %784 = vmatmul.f32.gmra.mxu0 %v648
      %v785 = vpop.f32.mrf.mxu0
      %v786 = vadd.f32 %v641, %v785
      %787 = vdwg.mxu0
      %788 = vmatpush.msra.mxu0 0.0
      %789 = vmatpush.msra.mxu0 0.0
      %790 = vmatpush.msra.mxu0 0.0
      %791 = vmatpush.msra.mxu0 0.0
      %792 = vmatpush.msra.mxu0 0.0
      %793 = vmatpush.msra.mxu0 0.0
      %794 = vmatpush.msra.mxu0 0.0
      %795 = vmatpush.msra.mxu0 0.0
      %796 = vmatpush.msra.mxu0 0.0
      %797 = vmatpush.msra.mxu0 0.0
      %798 = vmatpush.msra.mxu0 0.0
      %799 = vmatpush.msra.mxu0 0.0
      %800 = vmatpush.msra.mxu0 %v631
      %801 = vmatpush.msra.mxu0 %v623
      %802 = vmatpush.msra.mxu0 %v615
      %803 = vmatpush.msra.mxu0 %v607
      %804 = vmatmul.f32.gmra.mxu0 %v645
      %v805 = vpop.f32.mrf.mxu0
      %v806 = vadd.f32 %v636, %v805
      %807 = vmatmul.f32.gmra.mxu0 %v648
      %v808 = vpop.f32.mrf.mxu0
      %v809 = vadd.f32 %v641, %v808
      %810 = vdwg.mxu0
      %811 = vmatpush.msra.mxu0 0.0
      %812 = vmatpush.msra.mxu0 0.0
      %813 = vmatpush.msra.mxu0 0.0
      %814 = vmatpush.msra.mxu0 0.0
      %815 = vmatpush.msra.mxu0 0.0
      %816 = vmatpush.msra.mxu0 0.0
      %817 = vmatpush.msra.mxu0 0.0
      %818 = vmatpush.msra.mxu0 0.0
      %819 = vmatpush.msra.mxu0 0.0
      %820 = vmatpush.msra.mxu0 0.0
      %821 = vmatpush.msra.mxu0 0.0
      %822 = vmatpush.msra.mxu0 0.0
      %823 = vmatpush.msra.mxu0 %v632
      %824 = vmatpush.msra.mxu0 %v624
      %825 = vmatpush.msra.mxu0 %v616
      %826 = vmatpush.msra.mxu0 %v608
      %827 = vmatmul.f32.gmra.mxu0 %v645
      %v828 = vpop.f32.mrf.mxu0
      %v829 = vadd.f32 %v636, %v828
      %830 = vmatmul.f32.gmra.mxu0 %v648
      %v831 = vpop.f32.mrf.mxu0
      %v832 = vadd.f32 %v641, %v831
      %833 = vdwg.mxu0
      %834 = vst [vmem:[%s291] sm:$0xff] %v668
      %835 = vst [vmem:[%s291 + $0x8] sm:$0xff] %v691
      %836 = vst [vmem:[%s291 + $0x10] sm:$0xff] %v714
      %837 = vst [vmem:[%s291 + $0x18] sm:$0xff] %v737
      %838 = vst [vmem:[%s291 + $0x20] sm:$0xff] %v760
      %839 = vst [vmem:[%s291 + $0x28] sm:$0xff] %v783
      %840 = vst [vmem:[%s291 + $0x30] sm:$0xff] %v806
      %841 = vst [vmem:[%s291 + $0x38] sm:$0xff] %v829
      %842 = vst [vmem:[%s291 + $0x40] sm:$0x1] %v671
      %843 = vst [vmem:[%s291 + $0x48] sm:$0x1] %v694
      %844 = vst [vmem:[%s291 + $0x50] sm:$0x1] %v717
      %845 = vst [vmem:[%s291 + $0x58] sm:$0x1] %v740
      %846 = vst [vmem:[%s291 + $0x60] sm:$0x1] %v763
      %847 = vst [vmem:[%s291 + $0x68] sm:$0x1] %v786
      %848 = vst [vmem:[%s291 + $0x70] sm:$0x1] %v809
      %849 = vst [vmem:[%s291 + $0x78] sm:$0x1] %v832
      %v858 = vrot.slane %v668, 7
      %v859 = vrot.slane %v691, 7
      %v860 = vrot.slane %v714, 7
      %v861 = vrot.slane %v737, 7
      %v862 = vrot.slane %v760, 7
      %v863 = vrot.slane %v783, 7
      %v864 = vrot.slane %v806, 7
      %v865 = vrot.slane %v829, 7
      %vm874 = vcmp.gt.f32.partialorder %v668, %v858
      %vm875 = vcmp.gt.f32.partialorder %v691, %v859
      %vm876 = vcmp.gt.f32.partialorder %v714, %v860
      %vm877 = vcmp.gt.f32.partialorder %v737, %v861
      %vm878 = vcmp.gt.f32.partialorder %v760, %v862
      %vm879 = vcmp.gt.f32.partialorder %v783, %v863
      %vm880 = vcmp.gt.f32.partialorder %v806, %v864
      %vm881 = vcmp.gt.f32.partialorder %v829, %v865
      %v882 = vsel %vm874, %v668, %v858
      %v883 = vsel %vm875, %v691, %v859
      %v884 = vsel %vm876, %v714, %v860
      %v885 = vsel %vm877, %v737, %v861
      %v886 = vsel %vm878, %v760, %v862
      %v887 = vsel %vm879, %v783, %v863
      %v888 = vsel %vm880, %v806, %v864
      %v889 = vsel %vm881, %v829, %v865
      %v890 = vsel %vm874, 1, 0
      %v891 = vsel %vm875, 1, 0
      %v892 = vsel %vm876, 1, 0
      %v893 = vsel %vm877, 1, 0
      %v894 = vsel %vm878, 1, 0
      %v895 = vsel %vm879, 1, 0
      %v896 = vsel %vm880, 1, 0
      %v897 = vsel %vm881, 1, 0
      %v906 = vrot.slane %v882, 7
      %v907 = vrot.slane %v883, 7
      %v908 = vrot.slane %v884, 7
      %v909 = vrot.slane %v885, 7
      %v910 = vrot.slane %v886, 7
      %v911 = vrot.slane %v887, 7
      %v912 = vrot.slane %v888, 7
      %v913 = vrot.slane %v889, 7
      %vm922 = vcmp.gt.f32.partialorder %v668, %v906
      %vm923 = vcmp.gt.f32.partialorder %v691, %v907
      %vm924 = vcmp.gt.f32.partialorder %v714, %v908
      %vm925 = vcmp.gt.f32.partialorder %v737, %v909
      %vm926 = vcmp.gt.f32.partialorder %v760, %v910
      %vm927 = vcmp.gt.f32.partialorder %v783, %v911
      %vm928 = vcmp.gt.f32.partialorder %v806, %v912
      %vm929 = vcmp.gt.f32.partialorder %v829, %v913
      %v930 = vsel %vm922, %v668, %v906
      %v931 = vsel %vm923, %v691, %v907
      %v932 = vsel %vm924, %v714, %v908
      %v933 = vsel %vm925, %v737, %v909
      %v934 = vsel %vm926, %v760, %v910
      %v935 = vsel %vm927, %v783, %v911
      %v936 = vsel %vm928, %v806, %v912
      %v937 = vsel %vm929, %v829, %v913
      %v938 = vrot.slane %v890, 7
      %v939 = vrot.slane %v891, 7
      %v940 = vrot.slane %v892, 7
      %v941 = vrot.slane %v893, 7
      %v942 = vrot.slane %v894, 7
      %v943 = vrot.slane %v895, 7
      %v944 = vrot.slane %v896, 7
      %v945 = vrot.slane %v897, 7
      %v946 = vsel %vm922, 2, %v938
      %v947 = vsel %vm923, 2, %v939
      %v948 = vsel %vm924, 2, %v940
      %v949 = vsel %vm925, 2, %v941
      %v950 = vsel %vm926, 2, %v942
      %v951 = vsel %vm927, 2, %v943
      %v952 = vsel %vm928, 2, %v944
      %v953 = vsel %vm929, 2, %v945
      %v962 = vrot.slane %v930, 7
      %v963 = vrot.slane %v931, 7
      %v964 = vrot.slane %v932, 7
      %v965 = vrot.slane %v933, 7
      %v966 = vrot.slane %v934, 7
      %v967 = vrot.slane %v935, 7
      %v968 = vrot.slane %v936, 7
      %v969 = vrot.slane %v937, 7
      %vm978 = vcmp.gt.f32.partialorder %v668, %v962
      %vm979 = vcmp.gt.f32.partialorder %v691, %v963
      %vm980 = vcmp.gt.f32.partialorder %v714, %v964
      %vm981 = vcmp.gt.f32.partialorder %v737, %v965
      %vm982 = vcmp.gt.f32.partialorder %v760, %v966
      %vm983 = vcmp.gt.f32.partialorder %v783, %v967
      %vm984 = vcmp.gt.f32.partialorder %v806, %v968
      %vm985 = vcmp.gt.f32.partialorder %v829, %v969
      %v986 = vsel %vm978, %v668, %v962
      %v987 = vsel %vm979, %v691, %v963
      %v988 = vsel %vm980, %v714, %v964
      %v989 = vsel %vm981, %v737, %v965
      %v990 = vsel %vm982, %v760, %v966
      %v991 = vsel %vm983, %v783, %v967
      %v992 = vsel %vm984, %v806, %v968
      %v993 = vsel %vm985, %v829, %v969
      %v994 = vrot.slane %v946, 7
      %v995 = vrot.slane %v947, 7
      %v996 = vrot.slane %v948, 7
      %v997 = vrot.slane %v949, 7
      %v998 = vrot.slane %v950, 7
      %v999 = vrot.slane %v951, 7
      %v1000 = vrot.slane %v952, 7
      %v1001 = vrot.slane %v953, 7
      %v1002 = vsel %vm978, 3, %v994
      %v1003 = vsel %vm979, 3, %v995
      %v1004 = vsel %vm980, 3, %v996
      %v1005 = vsel %vm981, 3, %v997
      %v1006 = vsel %vm982, 3, %v998
      %v1007 = vsel %vm983, 3, %v999
      %v1008 = vsel %vm984, 3, %v1000
      %v1009 = vsel %vm985, 3, %v1001
      %v1018 = vrot.slane %v986, 7
      %v1019 = vrot.slane %v987, 7
      %v1020 = vrot.slane %v988, 7
      %v1021 = vrot.slane %v989, 7
      %v1022 = vrot.slane %v990, 7
      %v1023 = vrot.slane %v991, 7
      %v1024 = vrot.slane %v992, 7
      %v1025 = vrot.slane %v993, 7
      %vm1034 = vcmp.gt.f32.partialorder %v668, %v1018
      %vm1035 = vcmp.gt.f32.partialorder %v691, %v1019
      %vm1036 = vcmp.gt.f32.partialorder %v714, %v1020
      %vm1037 = vcmp.gt.f32.partialorder %v737, %v1021
      %vm1038 = vcmp.gt.f32.partialorder %v760, %v1022
      %vm1039 = vcmp.gt.f32.partialorder %v783, %v1023
      %vm1040 = vcmp.gt.f32.partialorder %v806, %v1024
      %vm1041 = vcmp.gt.f32.partialorder %v829, %v1025
      %v1042 = vsel %vm1034, %v668, %v1018
      %v1043 = vsel %vm1035, %v691, %v1019
      %v1044 = vsel %vm1036, %v714, %v1020
      %v1045 = vsel %vm1037, %v737, %v1021
      %v1046 = vsel %vm1038, %v760, %v1022
      %v1047 = vsel %vm1039, %v783, %v1023
      %v1048 = vsel %vm1040, %v806, %v1024
      %v1049 = vsel %vm1041, %v829, %v1025
      %v1050 = vrot.slane %v1002, 7
      %v1051 = vrot.slane %v1003, 7
      %v1052 = vrot.slane %v1004, 7
      %v1053 = vrot.slane %v1005, 7
      %v1054 = vrot.slane %v1006, 7
      %v1055 = vrot.slane %v1007, 7
      %v1056 = vrot.slane %v1008, 7
      %v1057 = vrot.slane %v1009, 7
      %v1058 = vsel %vm1034, 4, %v1050
      %v1059 = vsel %vm1035, 4, %v1051
      %v1060 = vsel %vm1036, 4, %v1052
      %v1061 = vsel %vm1037, 4, %v1053
      %v1062 = vsel %vm1038, 4, %v1054
      %v1063 = vsel %vm1039, 4, %v1055
      %v1064 = vsel %vm1040, 4, %v1056
      %v1065 = vsel %vm1041, 4, %v1057
      %v1074 = vrot.slane %v1042, 7
      %v1075 = vrot.slane %v1043, 7
      %v1076 = vrot.slane %v1044, 7
      %v1077 = vrot.slane %v1045, 7
      %v1078 = vrot.slane %v1046, 7
      %v1079 = vrot.slane %v1047, 7
      %v1080 = vrot.slane %v1048, 7
      %v1081 = vrot.slane %v1049, 7
      %vm1090 = vcmp.gt.f32.partialorder %v668, %v1074
      %vm1091 = vcmp.gt.f32.partialorder %v691, %v1075
      %vm1092 = vcmp.gt.f32.partialorder %v714, %v1076
      %vm1093 = vcmp.gt.f32.partialorder %v737, %v1077
      %vm1094 = vcmp.gt.f32.partialorder %v760, %v1078
      %vm1095 = vcmp.gt.f32.partialorder %v783, %v1079
      %vm1096 = vcmp.gt.f32.partialorder %v806, %v1080
      %vm1097 = vcmp.gt.f32.partialorder %v829, %v1081
      %v1098 = vsel %vm1090, %v668, %v1074
      %v1099 = vsel %vm1091, %v691, %v1075
      %v1100 = vsel %vm1092, %v714, %v1076
      %v1101 = vsel %vm1093, %v737, %v1077
      %v1102 = vsel %vm1094, %v760, %v1078
      %v1103 = vsel %vm1095, %v783, %v1079
      %v1104 = vsel %vm1096, %v806, %v1080
      %v1105 = vsel %vm1097, %v829, %v1081
      %v1106 = vrot.slane %v1058, 7
      %v1107 = vrot.slane %v1059, 7
      %v1108 = vrot.slane %v1060, 7
      %v1109 = vrot.slane %v1061, 7
      %v1110 = vrot.slane %v1062, 7
      %v1111 = vrot.slane %v1063, 7
      %v1112 = vrot.slane %v1064, 7
      %v1113 = vrot.slane %v1065, 7
      %v1114 = vsel %vm1090, 5, %v1106
      %v1115 = vsel %vm1091, 5, %v1107
      %v1116 = vsel %vm1092, 5, %v1108
      %v1117 = vsel %vm1093, 5, %v1109
      %v1118 = vsel %vm1094, 5, %v1110
      %v1119 = vsel %vm1095, 5, %v1111
      %v1120 = vsel %vm1096, 5, %v1112
      %v1121 = vsel %vm1097, 5, %v1113
      %v1130 = vrot.slane %v1098, 7
      %v1131 = vrot.slane %v1099, 7
      %v1132 = vrot.slane %v1100, 7
      %v1133 = vrot.slane %v1101, 7
      %v1134 = vrot.slane %v1102, 7
      %v1135 = vrot.slane %v1103, 7
      %v1136 = vrot.slane %v1104, 7
      %v1137 = vrot.slane %v1105, 7
      %vm1146 = vcmp.gt.f32.partialorder %v668, %v1130
      %vm1147 = vcmp.gt.f32.partialorder %v691, %v1131
      %vm1148 = vcmp.gt.f32.partialorder %v714, %v1132
      %vm1149 = vcmp.gt.f32.partialorder %v737, %v1133
      %vm1150 = vcmp.gt.f32.partialorder %v760, %v1134
      %vm1151 = vcmp.gt.f32.partialorder %v783, %v1135
      %vm1152 = vcmp.gt.f32.partialorder %v806, %v1136
      %vm1153 = vcmp.gt.f32.partialorder %v829, %v1137
      %v1154 = vsel %vm1146, %v668, %v1130
      %v1155 = vsel %vm1147, %v691, %v1131
      %v1156 = vsel %vm1148, %v714, %v1132
      %v1157 = vsel %vm1149, %v737, %v1133
      %v1158 = vsel %vm1150, %v760, %v1134
      %v1159 = vsel %vm1151, %v783, %v1135
      %v1160 = vsel %vm1152, %v806, %v1136
      %v1161 = vsel %vm1153, %v829, %v1137
      %v1162 = vrot.slane %v1114, 7
      %v1163 = vrot.slane %v1115, 7
      %v1164 = vrot.slane %v1116, 7
      %v1165 = vrot.slane %v1117, 7
      %v1166 = vrot.slane %v1118, 7
      %v1167 = vrot.slane %v1119, 7
      %v1168 = vrot.slane %v1120, 7
      %v1169 = vrot.slane %v1121, 7
      %v1170 = vsel %vm1146, 6, %v1162
      %v1171 = vsel %vm1147, 6, %v1163
      %v1172 = vsel %vm1148, 6, %v1164
      %v1173 = vsel %vm1149, 6, %v1165
      %v1174 = vsel %vm1150, 6, %v1166
      %v1175 = vsel %vm1151, 6, %v1167
      %v1176 = vsel %vm1152, 6, %v1168
      %v1177 = vsel %vm1153, 6, %v1169
      %v1186 = vrot.slane %v1154, 7
      %v1187 = vrot.slane %v1155, 7
      %v1188 = vrot.slane %v1156, 7
      %v1189 = vrot.slane %v1157, 7
      %v1190 = vrot.slane %v1158, 7
      %v1191 = vrot.slane %v1159, 7
      %v1192 = vrot.slane %v1160, 7
      %v1193 = vrot.slane %v1161, 7
      %vm1202 = vcmp.gt.f32.partialorder %v668, %v1186
      %vm1203 = vcmp.gt.f32.partialorder %v691, %v1187
      %vm1204 = vcmp.gt.f32.partialorder %v714, %v1188
      %vm1205 = vcmp.gt.f32.partialorder %v737, %v1189
      %vm1206 = vcmp.gt.f32.partialorder %v760, %v1190
      %vm1207 = vcmp.gt.f32.partialorder %v783, %v1191
      %vm1208 = vcmp.gt.f32.partialorder %v806, %v1192
      %vm1209 = vcmp.gt.f32.partialorder %v829, %v1193
      %v1210 = vsel %vm1202, %v668, %v1186
      %v1211 = vsel %vm1203, %v691, %v1187
      %v1212 = vsel %vm1204, %v714, %v1188
      %v1213 = vsel %vm1205, %v737, %v1189
      %v1214 = vsel %vm1206, %v760, %v1190
      %v1215 = vsel %vm1207, %v783, %v1191
      %v1216 = vsel %vm1208, %v806, %v1192
      %v1217 = vsel %vm1209, %v829, %v1193
      %v1218 = vrot.slane %v1170, 7
      %v1219 = vrot.slane %v1171, 7
      %v1220 = vrot.slane %v1172, 7
      %v1221 = vrot.slane %v1173, 7
      %v1222 = vrot.slane %v1174, 7
      %v1223 = vrot.slane %v1175, 7
      %v1224 = vrot.slane %v1176, 7
      %v1225 = vrot.slane %v1177, 7
      %v1226 = vsel %vm1202, 7, %v1218
      %v1227 = vsel %vm1203, 7, %v1219
      %v1228 = vsel %vm1204, 7, %v1220
      %v1229 = vsel %vm1205, 7, %v1221
      %v1230 = vsel %vm1206, 7, %v1222
      %v1231 = vsel %vm1207, 7, %v1223
      %v1232 = vsel %vm1208, 7, %v1224
      %v1233 = vsel %vm1209, 7, %v1225
      %v1242 = vrot.slane %v1210, 7
      %v1243 = vrot.slane %v1211, 7
      %v1244 = vrot.slane %v1212, 7
      %v1245 = vrot.slane %v1213, 7
      %v1246 = vrot.slane %v1214, 7
      %v1247 = vrot.slane %v1215, 7
      %v1248 = vrot.slane %v1216, 7
      %v1249 = vrot.slane %v1217, 7
      %vm1258 = vcmp.gt.f32.partialorder %v671, %v1242
      %vm1259 = vcmp.gt.f32.partialorder %v694, %v1243
      %vm1260 = vcmp.gt.f32.partialorder %v717, %v1244
      %vm1261 = vcmp.gt.f32.partialorder %v740, %v1245
      %vm1262 = vcmp.gt.f32.partialorder %v763, %v1246
      %vm1263 = vcmp.gt.f32.partialorder %v786, %v1247
      %vm1264 = vcmp.gt.f32.partialorder %v809, %v1248
      %vm1265 = vcmp.gt.f32.partialorder %v832, %v1249
      %v1266 = vrot.slane %v1226, 7
      %v1267 = vrot.slane %v1227, 7
      %v1268 = vrot.slane %v1228, 7
      %v1269 = vrot.slane %v1229, 7
      %v1270 = vrot.slane %v1230, 7
      %v1271 = vrot.slane %v1231, 7
      %v1272 = vrot.slane %v1232, 7
      %v1273 = vrot.slane %v1233, 7
      %v1274 = vsel %vm1258, 8, %v1266
      %v1275 = vsel %vm1259, 8, %v1267
      %v1276 = vsel %vm1260, 8, %v1268
      %v1277 = vsel %vm1261, 8, %v1269
      %v1278 = vsel %vm1262, 8, %v1270
      %v1279 = vsel %vm1263, 8, %v1271
      %v1280 = vsel %vm1264, 8, %v1272
      %v1281 = vsel %vm1265, 8, %v1273
      %v1282 = vrot.slane %v1275, 7
      %v1283 = vrot.slane %v1276, 6
      %v1284 = vrot.slane %v1277, 5
      %v1285 = vrot.slane %v1278, 4
      %v1286 = vrot.slane %v1279, 3
      %v1287 = vrot.slane %v1280, 2
      %v1288 = vrot.slane %v1281, 1
      %vm1289 = vcmask 1040384
      %v1290 = vsel %vm1289, %v1274, %v1282
      %vm1291 = vcmask 1042434
      %v1292 = vsel %vm1291, %v1283, %v1284
      %vm1293 = vcmask 1041408
      %v1294 = vsel %vm1293, %v1290, %v1292
      %vm1295 = vcmask 1044484
      %v1296 = vsel %vm1295, %v1285, %v1286
      %vm1297 = vcmask 1046534
      %v1298 = vsel %vm1297, %v1287, %v1288
      %vm1299 = vcmask 1045508
      %v1300 = vsel %vm1299, %v1296, %v1298
      %vm1301 = vcmask 1043456
      %v1302 = vsel %vm1301, %v1294, %v1300
      %1303 = vst [vmem:[%s295] sm:$0xff] %v1302
      %v1304 = vxor.u32 %v668, 2147483648
      %v1305 = vxor.u32 %v691, 2147483648
      %v1306 = vxor.u32 %v714, 2147483648
      %v1307 = vxor.u32 %v737, 2147483648
      %v1308 = vxor.u32 %v760, 2147483648
      %v1309 = vxor.u32 %v783, 2147483648
      %v1310 = vxor.u32 %v806, 2147483648
      %v1311 = vxor.u32 %v829, 2147483648
      %v1312 = vxor.u32 %v671, 2147483648
      %v1313 = vxor.u32 %v694, 2147483648
      %v1314 = vxor.u32 %v717, 2147483648
      %v1315 = vxor.u32 %v740, 2147483648
      %v1316 = vxor.u32 %v763, 2147483648
      %v1317 = vxor.u32 %v786, 2147483648
      %v1318 = vxor.u32 %v809, 2147483648
      %v1319 = vxor.u32 %v832, 2147483648
      %v1320 = vmul.f32 %v1304, 1.442695
      %v1321 = vpow.pop %v1320
      %v1322 = vmul.f32 %v1305, 1.442695
      %v1323 = vpow.pop %v1322
      %v1324 = vmul.f32 %v1306, 1.442695
      %v1325 = vpow.pop %v1324
      %v1326 = vmul.f32 %v1307, 1.442695
      %v1327 = vpow.pop %v1326
      %v1328 = vmul.f32 %v1308, 1.442695
      %v1329 = vpow.pop %v1328
      %v1330 = vmul.f32 %v1309, 1.442695
      %v1331 = vpow.pop %v1330
      %v1332 = vmul.f32 %v1310, 1.442695
      %v1333 = vpow.pop %v1332
      %v1334 = vmul.f32 %v1311, 1.442695
      %v1335 = vpow.pop %v1334
      %v1336 = vmul.f32 %v1312, 1.442695
      %v1337 = vpow.pop %v1336
      %v1338 = vmul.f32 %v1313, 1.442695
      %v1339 = vpow.pop %v1338
      %v1340 = vmul.f32 %v1314, 1.442695
      %v1341 = vpow.pop %v1340
      %v1342 = vmul.f32 %v1315, 1.442695
      %v1343 = vpow.pop %v1342
      %v1344 = vmul.f32 %v1316, 1.442695
      %v1345 = vpow.pop %v1344
      %v1346 = vmul.f32 %v1317, 1.442695
      %v1347 = vpow.pop %v1346
      %v1348 = vmul.f32 %v1318, 1.442695
      %v1349 = vpow.pop %v1348
      %v1350 = vmul.f32 %v1319, 1.442695
      %v1351 = vpow.pop %v1350
      %v1352 = vadd.f32 %v1321, 1.0
      %v1353 = vadd.f32 %v1323, 1.0
      %v1354 = vadd.f32 %v1325, 1.0
      %v1355 = vadd.f32 %v1327, 1.0
      %v1356 = vadd.f32 %v1329, 1.0
      %v1357 = vadd.f32 %v1331, 1.0
      %v1358 = vadd.f32 %v1333, 1.0
      %v1359 = vadd.f32 %v1335, 1.0
      %v1360 = vadd.f32 %v1337, 1.0
      %v1361 = vadd.f32 %v1339, 1.0
      %v1362 = vadd.f32 %v1341, 1.0
      %v1363 = vadd.f32 %v1343, 1.0
      %v1364 = vadd.f32 %v1345, 1.0
      %v1365 = vadd.f32 %v1347, 1.0
      %v1366 = vadd.f32 %v1349, 1.0
      %v1367 = vadd.f32 %v1351, 1.0
      %v1368 = vrcp.pop %v1352
      %v1369 = vmul.f32 %v1352, %v1368
      %v1370 = vsub.f32 1.0, %v1369
      %v1371 = vmul.f32 %v1368, %v1370
      %v1372 = vadd.f32 %v1368, %v1371
      %vm1373 = vweird.f32 %v1352
      %vm1374 = vweird.f32 %v1368
      %vm1375 = vmor %vm1373, %vm1374
      %v1376 = vsel %vm1375, %v1368, %v1372
      %v1377 = vand.u32 2147483647, %v1352
      %vm1378 = vcmp.eq.f32.partialorder %v1377, 8.507059e+37
      %v1379 = vand.u32 %v1352, 2147483648
      %v1380 = vor.u32 1.1754944e-38, %v1379
      %v1381 = vsel %vm1378, %v1380, %v1376
      %v1382 = vmul.f32 1.0, %v1381
      %v1383 = vrcp.pop %v1353
      %v1384 = vmul.f32 %v1353, %v1383
      %v1385 = vsub.f32 1.0, %v1384
      %v1386 = vmul.f32 %v1383, %v1385
      %v1387 = vadd.f32 %v1383, %v1386
      %vm1388 = vweird.f32 %v1353
      %vm1389 = vweird.f32 %v1383
      %vm1390 = vmor %vm1388, %vm1389
      %v1391 = vsel %vm1390, %v1383, %v1387
      %v1392 = vand.u32 2147483647, %v1353
      %vm1393 = vcmp.eq.f32.partialorder %v1392, 8.507059e+37
      %v1394 = vand.u32 %v1353, 2147483648
      %v1395 = vor.u32 1.1754944e-38, %v1394
      %v1396 = vsel %vm1393, %v1395, %v1391
      %v1397 = vmul.f32 1.0, %v1396
      %v1398 = vrcp.pop %v1354
      %v1399 = vmul.f32 %v1354, %v1398
      %v1400 = vsub.f32 1.0, %v1399
      %v1401 = vmul.f32 %v1398, %v1400
      %v1402 = vadd.f32 %v1398, %v1401
      %vm1403 = vweird.f32 %v1354
      %vm1404 = vweird.f32 %v1398
      %vm1405 = vmor %vm1403, %vm1404
      %v1406 = vsel %vm1405, %v1398, %v1402
      %v1407 = vand.u32 2147483647, %v1354
      %vm1408 = vcmp.eq.f32.partialorder %v1407, 8.507059e+37
      %v1409 = vand.u32 %v1354, 2147483648
      %v1410 = vor.u32 1.1754944e-38, %v1409
      %v1411 = vsel %vm1408, %v1410, %v1406
      %v1412 = vmul.f32 1.0, %v1411
      %v1413 = vrcp.pop %v1355
      %v1414 = vmul.f32 %v1355, %v1413
      %v1415 = vsub.f32 1.0, %v1414
      %v1416 = vmul.f32 %v1413, %v1415
      %v1417 = vadd.f32 %v1413, %v1416
      %vm1418 = vweird.f32 %v1355
      %vm1419 = vweird.f32 %v1413
      %vm1420 = vmor %vm1418, %vm1419
      %v1421 = vsel %vm1420, %v1413, %v1417
      %v1422 = vand.u32 2147483647, %v1355
      %vm1423 = vcmp.eq.f32.partialorder %v1422, 8.507059e+37
      %v1424 = vand.u32 %v1355, 2147483648
      %v1425 = vor.u32 1.1754944e-38, %v1424
      %v1426 = vsel %vm1423, %v1425, %v1421
      %v1427 = vmul.f32 1.0, %v1426
      %v1428 = vrcp.pop %v1356
      %v1429 = vmul.f32 %v1356, %v1428
      %v1430 = vsub.f32 1.0, %v1429
      %v1431 = vmul.f32 %v1428, %v1430
      %v1432 = vadd.f32 %v1428, %v1431
      %vm1433 = vweird.f32 %v1356
      %vm1434 = vweird.f32 %v1428
      %vm1435 = vmor %vm1433, %vm1434
      %v1436 = vsel %vm1435, %v1428, %v1432
      %v1437 = vand.u32 2147483647, %v1356
      %vm1438 = vcmp.eq.f32.partialorder %v1437, 8.507059e+37
      %v1439 = vand.u32 %v1356, 2147483648
      %v1440 = vor.u32 1.1754944e-38, %v1439
      %v1441 = vsel %vm1438, %v1440, %v1436
      %v1442 = vmul.f32 1.0, %v1441
      %v1443 = vrcp.pop %v1357
      %v1444 = vmul.f32 %v1357, %v1443
      %v1445 = vsub.f32 1.0, %v1444
      %v1446 = vmul.f32 %v1443, %v1445
      %v1447 = vadd.f32 %v1443, %v1446
      %vm1448 = vweird.f32 %v1357
      %vm1449 = vweird.f32 %v1443
      %vm1450 = vmor %vm1448, %vm1449
      %v1451 = vsel %vm1450, %v1443, %v1447
      %v1452 = vand.u32 2147483647, %v1357
      %vm1453 = vcmp.eq.f32.partialorder %v1452, 8.507059e+37
      %v1454 = vand.u32 %v1357, 2147483648
      %v1455 = vor.u32 1.1754944e-38, %v1454
      %v1456 = vsel %vm1453, %v1455, %v1451
      %v1457 = vmul.f32 1.0, %v1456
      %v1458 = vrcp.pop %v1358
      %v1459 = vmul.f32 %v1358, %v1458
      %v1460 = vsub.f32 1.0, %v1459
      %v1461 = vmul.f32 %v1458, %v1460
      %v1462 = vadd.f32 %v1458, %v1461
      %vm1463 = vweird.f32 %v1358
      %vm1464 = vweird.f32 %v1458
      %vm1465 = vmor %vm1463, %vm1464
      %v1466 = vsel %vm1465, %v1458, %v1462
      %v1467 = vand.u32 2147483647, %v1358
      %vm1468 = vcmp.eq.f32.partialorder %v1467, 8.507059e+37
      %v1469 = vand.u32 %v1358, 2147483648
      %v1470 = vor.u32 1.1754944e-38, %v1469
      %v1471 = vsel %vm1468, %v1470, %v1466
      %v1472 = vmul.f32 1.0, %v1471
      %v1473 = vrcp.pop %v1359
      %v1474 = vmul.f32 %v1359, %v1473
      %v1475 = vsub.f32 1.0, %v1474
      %v1476 = vmul.f32 %v1473, %v1475
      %v1477 = vadd.f32 %v1473, %v1476
      %vm1478 = vweird.f32 %v1359
      %vm1479 = vweird.f32 %v1473
      %vm1480 = vmor %vm1478, %vm1479
      %v1481 = vsel %vm1480, %v1473, %v1477
      %v1482 = vand.u32 2147483647, %v1359
      %vm1483 = vcmp.eq.f32.partialorder %v1482, 8.507059e+37
      %v1484 = vand.u32 %v1359, 2147483648
      %v1485 = vor.u32 1.1754944e-38, %v1484
      %v1486 = vsel %vm1483, %v1485, %v1481
      %v1487 = vmul.f32 1.0, %v1486
      %v1488 = vrcp.pop %v1360
      %v1489 = vmul.f32 %v1360, %v1488
      %v1490 = vsub.f32 1.0, %v1489
      %v1491 = vmul.f32 %v1488, %v1490
      %v1492 = vadd.f32 %v1488, %v1491
      %vm1493 = vweird.f32 %v1360
      %vm1494 = vweird.f32 %v1488
      %vm1495 = vmor %vm1493, %vm1494
      %v1496 = vsel %vm1495, %v1488, %v1492
      %v1497 = vand.u32 2147483647, %v1360
      %vm1498 = vcmp.eq.f32.partialorder %v1497, 8.507059e+37
      %v1499 = vand.u32 %v1360, 2147483648
      %v1500 = vor.u32 1.1754944e-38, %v1499
      %v1501 = vsel %vm1498, %v1500, %v1496
      %v1502 = vmul.f32 1.0, %v1501
      %v1503 = vrcp.pop %v1361
      %v1504 = vmul.f32 %v1361, %v1503
      %v1505 = vsub.f32 1.0, %v1504
      %v1506 = vmul.f32 %v1503, %v1505
      %v1507 = vadd.f32 %v1503, %v1506
      %vm1508 = vweird.f32 %v1361
      %vm1509 = vweird.f32 %v1503
      %vm1510 = vmor %vm1508, %vm1509
      %v1511 = vsel %vm1510, %v1503, %v1507
      %v1512 = vand.u32 2147483647, %v1361
      %vm1513 = vcmp.eq.f32.partialorder %v1512, 8.507059e+37
      %v1514 = vand.u32 %v1361, 2147483648
      %v1515 = vor.u32 1.1754944e-38, %v1514
      %v1516 = vsel %vm1513, %v1515, %v1511
      %v1517 = vmul.f32 1.0, %v1516
      %v1518 = vrcp.pop %v1362
      %v1519 = vmul.f32 %v1362, %v1518
      %v1520 = vsub.f32 1.0, %v1519
      %v1521 = vmul.f32 %v1518, %v1520
      %v1522 = vadd.f32 %v1518, %v1521
      %vm1523 = vweird.f32 %v1362
      %vm1524 = vweird.f32 %v1518
      %vm1525 = vmor %vm1523, %vm1524
      %v1526 = vsel %vm1525, %v1518, %v1522
      %v1527 = vand.u32 2147483647, %v1362
      %vm1528 = vcmp.eq.f32.partialorder %v1527, 8.507059e+37
      %v1529 = vand.u32 %v1362, 2147483648
      %v1530 = vor.u32 1.1754944e-38, %v1529
      %v1531 = vsel %vm1528, %v1530, %v1526
      %v1532 = vmul.f32 1.0, %v1531
      %v1533 = vrcp.pop %v1363
      %v1534 = vmul.f32 %v1363, %v1533
      %v1535 = vsub.f32 1.0, %v1534
      %v1536 = vmul.f32 %v1533, %v1535
      %v1537 = vadd.f32 %v1533, %v1536
      %vm1538 = vweird.f32 %v1363
      %vm1539 = vweird.f32 %v1533
      %vm1540 = vmor %vm1538, %vm1539
      %v1541 = vsel %vm1540, %v1533, %v1537
      %v1542 = vand.u32 2147483647, %v1363
      %vm1543 = vcmp.eq.f32.partialorder %v1542, 8.507059e+37
      %v1544 = vand.u32 %v1363, 2147483648
      %v1545 = vor.u32 1.1754944e-38, %v1544
      %v1546 = vsel %vm1543, %v1545, %v1541
      %v1547 = vmul.f32 1.0, %v1546
      %v1548 = vrcp.pop %v1364
      %v1549 = vmul.f32 %v1364, %v1548
      %v1550 = vsub.f32 1.0, %v1549
      %v1551 = vmul.f32 %v1548, %v1550
      %v1552 = vadd.f32 %v1548, %v1551
      %vm1553 = vweird.f32 %v1364
      %vm1554 = vweird.f32 %v1548
      %vm1555 = vmor %vm1553, %vm1554
      %v1556 = vsel %vm1555, %v1548, %v1552
      %v1557 = vand.u32 2147483647, %v1364
      %vm1558 = vcmp.eq.f32.partialorder %v1557, 8.507059e+37
      %v1559 = vand.u32 %v1364, 2147483648
      %v1560 = vor.u32 1.1754944e-38, %v1559
      %v1561 = vsel %vm1558, %v1560, %v1556
      %v1562 = vmul.f32 1.0, %v1561
      %v1563 = vrcp.pop %v1365
      %v1564 = vmul.f32 %v1365, %v1563
      %v1565 = vsub.f32 1.0, %v1564
      %v1566 = vmul.f32 %v1563, %v1565
      %v1567 = vadd.f32 %v1563, %v1566
      %vm1568 = vweird.f32 %v1365
      %vm1569 = vweird.f32 %v1563
      %vm1570 = vmor %vm1568, %vm1569
      %v1571 = vsel %vm1570, %v1563, %v1567
      %v1572 = vand.u32 2147483647, %v1365
      %vm1573 = vcmp.eq.f32.partialorder %v1572, 8.507059e+37
      %v1574 = vand.u32 %v1365, 2147483648
      %v1575 = vor.u32 1.1754944e-38, %v1574
      %v1576 = vsel %vm1573, %v1575, %v1571
      %v1577 = vmul.f32 1.0, %v1576
      %v1578 = vrcp.pop %v1366
      %v1579 = vmul.f32 %v1366, %v1578
      %v1580 = vsub.f32 1.0, %v1579
      %v1581 = vmul.f32 %v1578, %v1580
      %v1582 = vadd.f32 %v1578, %v1581
      %vm1583 = vweird.f32 %v1366
      %vm1584 = vweird.f32 %v1578
      %vm1585 = vmor %vm1583, %vm1584
      %v1586 = vsel %vm1585, %v1578, %v1582
      %v1587 = vand.u32 2147483647, %v1366
      %vm1588 = vcmp.eq.f32.partialorder %v1587, 8.507059e+37
      %v1589 = vand.u32 %v1366, 2147483648
      %v1590 = vor.u32 1.1754944e-38, %v1589
      %v1591 = vsel %vm1588, %v1590, %v1586
      %v1592 = vmul.f32 1.0, %v1591
      %v1593 = vrcp.pop %v1367
      %v1594 = vmul.f32 %v1367, %v1593
      %v1595 = vsub.f32 1.0, %v1594
      %v1596 = vmul.f32 %v1593, %v1595
      %v1597 = vadd.f32 %v1593, %v1596
      %vm1598 = vweird.f32 %v1367
      %vm1599 = vweird.f32 %v1593
      %vm1600 = vmor %vm1598, %vm1599
      %v1601 = vsel %vm1600, %v1593, %v1597
      %v1602 = vand.u32 2147483647, %v1367
      %vm1603 = vcmp.eq.f32.partialorder %v1602, 8.507059e+37
      %v1604 = vand.u32 %v1367, 2147483648
      %v1605 = vor.u32 1.1754944e-38, %v1604
      %v1606 = vsel %vm1603, %v1605, %v1601
      %v1607 = vmul.f32 1.0, %v1606
      %vm1608 = vcmask 1047557
      %v1609 = vsel %vm1608, %v1382, 0.0
      %v1610 = vsel %vm1608, %v1397, 0.0
      %v1611 = vadd.f32 %v1609, %v1610
      %v1612 = vsel %vm1608, %v1412, 0.0
      %v1613 = vadd.f32 %v1611, %v1612
      %v1614 = vsel %vm1608, %v1427, 0.0
      %v1615 = vadd.f32 %v1613, %v1614
      %v1616 = vsel %vm1608, %v1442, 0.0
      %v1617 = vadd.f32 %v1615, %v1616
      %v1618 = vsel %vm1608, %v1457, 0.0
      %v1619 = vadd.f32 %v1617, %v1618
      %v1620 = vsel %vm1608, %v1472, 0.0
      %v1621 = vadd.f32 %v1619, %v1620
      %v1622 = vsel %vm1608, %v1487, 0.0
      %v1623 = vadd.f32 %v1621, %v1622
      %1624 = vadd.xlane.f32.xlu0 %v1623
      %v1625 = vpop.xlane.xlu0 %1624
      %v1626 = vsel %vm1289, %v1502, 0.0
      %v1627 = vsel %vm1289, %v1517, 0.0
      %v1628 = vadd.f32 %v1626, %v1627
      %v1629 = vsel %vm1289, %v1532, 0.0
      %v1630 = vadd.f32 %v1628, %v1629
      %v1631 = vsel %vm1289, %v1547, 0.0
      %v1632 = vadd.f32 %v1630, %v1631
      %v1633 = vsel %vm1289, %v1562, 0.0
      %v1634 = vadd.f32 %v1632, %v1633
      %v1635 = vsel %vm1289, %v1577, 0.0
      %v1636 = vadd.f32 %v1634, %v1635
      %v1637 = vsel %vm1289, %v1592, 0.0
      %v1638 = vadd.f32 %v1636, %v1637
      %v1639 = vsel %vm1289, %v1607, 0.0
      %v1640 = vadd.f32 %v1638, %v1639
      %1641 = vadd.xlane.f32.xlu0 %v1640
      %v1642 = vpop.xlane.xlu0 %1641
      %v1643 = vmul.f32 %v1625, 0.0009765625
      %v1644 = vmul.f32 %v1642, 0.0009765625
      %vm1645 = vcmask 7173
      %1646 = vst.msk [vmem:[%s299 - $0x5] sm:$0xe0] %vm1645, %v1643
      %vm1647 = vcmask 0
      %1648 = vst.msk [vmem:[%s299 + $0x3] sm:$0x1] %vm1647, %v1644
      %p1649 = scmp.lt.s32.totalorder %s19, 1
      %s1650 = scalar_select %p1649, %s19, 1
      %s1651 = smul.addr %s1650, 16
      %s1652 = smul.addr %s1651, 8
      %s1653 = scalar_lea.vmem %s5, %s1652
      %p1654 = scmp.lt.s32.totalorder %s19, 1
      %s1655 = scalar_select %p1654, %s19, 1
      %s1656 = smul.addr %s1655, 8
      %s1657 = scalar_lea.vmem %s6, %s1656
      %p1658 = scmp.lt.s32.totalorder %s19, 1
      %s1659 = scalar_select %p1658, %s19, 1
      %s1660 = smul.addr %s1659, 4
      %s1661 = scalar_lea.vmem %s7, %s1660
      // Predicated region
      $region41: #{forward.3} parent=39 // pred_check
        %p1662 = pneg %p147
      $region42: #{forward.3} parent=39 // pred_check_branch
        %1664 = sbr.rel (%p1662) target = $region44
      $region43: #{forward.3} parent=39 // pred_region
        _
      $region44: #{forward.3} parent=39 // pred_fallthru
        _
      // Predicated region
      $region45: #{forward.3} parent=39 // pred_check
        %p1665 = pneg %p173
      $region46: #{forward.3} parent=39 // pred_check_branch
        %1667 = sbr.rel (%p1665) target = $region48
      $region47: #{forward.3} parent=39 // pred_region
        _
      $region48: #{forward.3} parent=39 // pred_fallthru
        _
      // Predicated region
      $region49: #{forward.3} parent=39 // pred_check
        %p1668 = pneg %p199
      $region50: #{forward.3} parent=39 // pred_check_branch
        %1670 = sbr.rel (%p1668) target = $region52
      $region51: #{forward.3} parent=39 // pred_region
        _
      $region52: #{forward.3} parent=39 // pred_fallthru
        _
    $region40: #{forward.3} parent=5 // pred_fallthru
      _
    %p1671 = scmp.le.s32.totalorder 2, %s14
    // Predicated region
    $region53: #{forward.3} parent=5 // pred_check
      %p1672 = pneg %p1671
    $region54: #{forward.3} parent=5 // pred_check_branch
      %1674 = sbr.rel (%p1672) target = $region56
    $region55: #{forward.3} parent=5 // pred_region
      %s1675 = ssub.s32 %s14, 2
      // Predicated region
      $region57: #{forward.3} parent=55 // pred_check
        %p1676 = pneg %p153
      $region58: #{forward.3} parent=55 // pred_check_branch
        %1678 = sbr.rel (%p1676) target = $region60
      $region59: #{forward.3} parent=55 // pred_region
        %p1679 = scmp.lt.s32.totalorder %s20, 1
        %s1680 = scalar_select %p1679, %s20, 1
        %s1681 = smul.addr %s1680, 16
        %s1682 = smul.addr %s1681, 8
        %s1683 = scalar_lea.vmem %s5, %s1682
      $region60: #{forward.3} parent=55 // pred_fallthru
        _
      // Predicated region
      $region61: #{forward.3} parent=55 // pred_check
        %p1684 = pneg %p179
      $region62: #{forward.3} parent=55 // pred_check_branch
        %1686 = sbr.rel (%p1684) target = $region64
      $region63: #{forward.3} parent=55 // pred_region
        %p1687 = scmp.lt.s32.totalorder %s20, 1
        %s1688 = scalar_select %p1687, %s20, 1
        %s1689 = smul.addr %s1688, 8
        %s1690 = scalar_lea.vmem %s6, %s1689
      $region64: #{forward.3} parent=55 // pred_fallthru
        _
      // Predicated region
      $region65: #{forward.3} parent=55 // pred_check
        %p1691 = pneg %p205
      $region66: #{forward.3} parent=55 // pred_check_branch
        %1693 = sbr.rel (%p1691) target = $region68
      $region67: #{forward.3} parent=55 // pred_region
        %p1694 = scmp.lt.s32.totalorder %s20, 1
        %s1695 = scalar_select %p1694, %s20, 1
        %s1696 = smul.addr %s1695, 4
        %s1697 = scalar_lea.vmem %s7, %s1696
      $region68: #{forward.3} parent=55 // pred_fallthru
        _
    $region56: #{forward.3} parent=5 // pred_fallthru
      _
  $region6: #{forward.3} parent=0 // loop_footer
    %s18 = sadd.s32 1, %s14
  $region7: #{forward.3} parent=0 // loop_footer_branch
    %13 = sbr.rel target = $region3
  $region8: #{forward.3} parent=0 // loop_exit
    _

</llo_original>
